<compile_context>
chip_gen: v5e
topology: v5e:2x2
jax: 0.10.0
libtpu: 0.0.40
codegen_flags: <defaults>
</compile_context>

<pallas_src>
import jax
import jax.numpy as jnp
from jax.experimental import pallas as pl
from jax.experimental.pallas import tpu as pltpu

ADAPT_LAYERS = (3, 6, 9, 12)   # 1-indexed, matches `hidden[layer - 1]` in the
                               # PyTorch MultiLevelAdapter (hidden[0] = layer-1 output)


def _round_up(x, m):
    return (x + m - 1) // m * m


def _default_vmem_limit_bytes():
    try:
        kind = jax.devices()[0].device_kind.lower()
    except Exception:
        kind = ""
    if "v7" in kind:
        return 48 * 1024 * 1024   # 64 MiB physical; leave Mosaic scratch headroom
    if "v5" in kind or "v6" in kind:
        return 96 * 1024 * 1024   # 128 MiB physical on v5e / v6e
    return 64 * 1024 * 1024


# ----------------------------------------------------------------------------
# Pallas kernel: MultiLevelAdapter hot path (per row tile of tm tokens)
#   for each of the 4 tapped layers g:
#     lat_g = relu(hidden_g @ Wd_g)        (MXU, bf16 in / f32 acc)
#     up   += lat_g @ Wu_g                 (MXU, f32 accumulation)
#   out = x + relu(up)                     (VPU, f32 residual, cast on store)
# Equivalent to concat(lat_0..lat_3) @ Wu because ReLU precedes the up proj.
# ----------------------------------------------------------------------------
def _adapter_kernel(x_ref, h0_ref, h1_ref, h2_ref, h3_ref, wd_ref, wu_ref, o_ref):
    compute_dtype = wd_ref.dtype
    up = None
    for g, h_ref in enumerate((h0_ref, h1_ref, h2_ref, h3_ref)):   # static unroll
        hg = h_ref[...].astype(compute_dtype)          # f32 HBM stream -> bf16 vregs
        lat = jnp.dot(hg, wd_ref[g], preferred_element_type=jnp.float32)
        lat = jnp.maximum(lat, 0.0).astype(compute_dtype)           # DownSampler ReLU
        contrib = jnp.dot(lat, wu_ref[g], preferred_element_type=jnp.float32)
        up = contrib if up is None else up + contrib
    up = jnp.maximum(up, 0.0)                                        # UpSampler ReLU
    o_ref[...] = (x_ref[...].astype(jnp.float32) + up).astype(o_ref.dtype)


def multilevel_adapter(x, hidden, w_down, w_up, *, tm=512,
                       compute_dtype=jnp.bfloat16, out_dtype=None,
                       vmem_limit_bytes=None):
    """x: [B, S, D]; hidden: list of >=12 arrays [B, S, D];
    w_down: [4, D, D//r]; w_up: [4*(D//r), D].  Returns [B, S, D]."""
    B, S, D = x.shape
    M = B * S
    G, Dw, Dr = w_down.shape
    assert G == len(ADAPT_LAYERS) and Dw == D
    assert w_up.shape == (G * Dr, D)
    out_dtype = x.dtype if out_dtype is None else out_dtype
    if vmem_limit_bytes is None:
        vmem_limit_bytes = _default_vmem_limit_bytes()

    # Row tile: multiple of 16 (bf16 sublane packing), clamped to the problem
    # size, and capped so the (parallel) grid has >= 2 steps when possible so
    # v7x megacore can split the row axis across its two TensorCores.
    tm = max(16, min(tm, _round_up(M, 16)))
    if M > 16 and pl.cdiv(M, tm) < 2:
        tm = max(16, _round_up(-(-M // 2), 16))
    grid = pl.cdiv(M, tm)

    # No padding and no stacking: hidden states stay f32 in HBM; reshape to
    # (M, D) is a metadata-only view.  The partial last block is masked by
    # Pallas on the output writeback.
    x2 = x.reshape(M, D)
    hs = [hidden[l - 1].reshape(M, D) for l in ADAPT_LAYERS]

    # Small, grid-invariant weights: cast once in the wrapper, resident in VMEM.
    wd = w_down.astype(compute_dtype)                    # (G, D, Dr)
    wu = w_up.reshape(G, Dr, D).astype(compute_dtype)    # (G, Dr, D)

    bytes_in = (x2.size * x2.dtype.itemsize
                + sum(h.size * h.dtype.itemsize for h in hs)
                + wd.size * wd.dtype.itemsize + wu.size * wu.dtype.itemsize)
    bytes_out = M * D * jnp.dtype(out_dtype).itemsize
    cost = pl.CostEstimate(flops=int(4 * M * G * D * Dr), transcendentals=0,
                           bytes_accessed=int(bytes_in + bytes_out))

    row_spec = pl.BlockSpec((tm, D), lambda i: (i, 0))

    def run(weight_mode):
        if weight_mode is None:
            wd_spec = pl.BlockSpec((G, D, Dr), lambda i: (0, 0, 0))
            wu_spec = pl.BlockSpec((G, Dr, D), lambda i: (0, 0, 0))
        else:
            wd_spec = pl.BlockSpec((G, D, Dr), lambda i: (0, 0, 0),
                                   pipeline_mode=weight_mode)
            wu_spec = pl.BlockSpec((G, Dr, D), lambda i: (0, 0, 0),
                                   pipeline_mode=weight_mode)
        return pl.pallas_call(
            _adapter_kernel,
            out_shape=jax.ShapeDtypeStruct((M, D), out_dtype),
            grid_spec=pltpu.PrefetchScalarGridSpec(
                num_scalar_prefetch=0,
                grid=(grid,),
                in_specs=[row_spec] + [row_spec] * G + [wd_spec, wu_spec],
                out_specs=row_spec,
            ),
            compiler_params=pltpu.CompilerParams(
                dimension_semantics=("parallel",),
                vmem_limit_bytes=vmem_limit_bytes),
            cost_estimate=cost,
        )(x2, *hs, wd, wu)

    # Grid-invariant weights only need a single buffer; fall back to default
    # double-buffering if this Pallas build rejects pipeline_mode/Buffered(1).
    try:
        out = run(pl.Buffered(1) if hasattr(pl, "Buffered") else None)
    except Exception:
        out = run(None)

    return out.reshape(B, S, D)


# ----------------------------------------------------------------------------
# Plain-JAX glue: toy deterministic stand-in for the frozen BLIP visual encoder
# (patchify NCHW image -> linear patch-embed -> CLS token -> 12 toy layers),
# just to feed the adapter with image_embeds and a 12-deep hidden-state stack.
# ----------------------------------------------------------------------------
def toy_visual_encoder(image, patch_embed_w, cls_token, layer_ws):
    B, C, H, W = image.shape
    P = 4
    patches = image.reshape(B, C, H // P, P, W // P, P)
    patches = patches.transpose(0, 2, 4, 1, 3, 5).reshape(
        B, (H // P) * (W // P), C * P * P)
    h = patches @ patch_embed_w                       # [B, S-1, D]
    cls = jnp.broadcast_to(cls_token, (B, 1, h.shape[-1]))
    h = jnp.concatenate([cls, h], axis=1)             # [B, S, D] (CLS prepended)
    hidden = []
    for w in layer_ws:                                # 12 toy "transformer" layers
        h = jnp.maximum(h @ w, 0.0) + h
        hidden.append(h)
    return h, hidden                                  # image_embeds, hidden states


def adapter_blip_forward(image, params):
    image_embeds, hidden = toy_visual_encoder(
        image, params["patch_embed_w"], params["cls_token"], params["layer_ws"])
    # image_atts = ones(image_embeds.shape[:-1]) is consumed only by the
    # external frozen text encoder (see TODO at top), so it is not materialized.
    adapted = multilevel_adapter(
        image_embeds, hidden, params["w_down"], params["w_up"])
    return adapted


# ----------------------------------------------------------------------------
# Pure-JAX reference of MultiLevelAdapter mirroring the kernel's bf16 matmuls
# (same math: per-group down/up with f32 accumulation, ReLU, residual).
# ----------------------------------------------------------------------------
def adapter_reference(x, hidden, w_down, w_up, compute_dtype=jnp.bfloat16):
    G, D, Dr = w_down.shape
    wd = w_down.astype(compute_dtype)
    wu = w_up.reshape(G, Dr, D).astype(compute_dtype)
    up = jnp.zeros(x.shape, jnp.float32)
    for i, l in enumerate(ADAPT_LAYERS):
        h = hidden[l - 1].astype(compute_dtype)
        lat = jnp.einsum("bsd,dr->bsr", h, wd[i],
                         preferred_element_type=jnp.float32)
        lat = jnp.maximum(lat, 0.0).astype(compute_dtype)
        up = up + jnp.einsum("bsr,rd->bsd", lat, wu[i],
                             preferred_element_type=jnp.float32)
    return (x.astype(jnp.float32) + jnp.maximum(up, 0.0)).astype(x.dtype)


if __name__ == "__main__":
    key = jax.random.PRNGKey(0)
    B, C, H, W = 2, 3, 16, 16          # image
    P = 4
    S = (H // P) * (W // P) + 1        # 16 patches + CLS = 17 (partial-block tail)
    D = 128                            # toy vision_width (lane-dense output)
    reduction = 2
    Dr = D // reduction                # 64
    Dc = Dr * len(ADAPT_LAYERS)        # 256

    keys = jax.random.split(key, 17)
    image = jax.random.normal(keys[0], (B, C, H, W), jnp.float32)
    patch_embed_w = 0.05 * jax.random.normal(keys[1], (C * P * P, D), jnp.float32)
    cls_token = 0.05 * jax.random.normal(keys[2], (1, 1, D), jnp.float32)
    layer_ws = [0.05 * jax.random.normal(keys[3 + i], (D, D), jnp.float32)
                for i in range(12)]
    # MultiLevelAdapter parameters (DownSampler x4, UpSampler), bias=False
    w_down = 0.1 * jax.random.normal(keys[15], (4, D, Dr), jnp.float32)
    w_up = 0.1 * jax.random.normal(keys[16], (Dc, D), jnp.float32)

    params = dict(patch_embed_w=patch_embed_w, cls_token=cls_token,
                  layer_ws=layer_ws, w_down=w_down, w_up=w_up)

    out = adapter_blip_forward(image, params)
    out = jax.block_until_ready(out)

    # correctness check of the Pallas adapter against a pure-JAX reference
    image_embeds, hidden = toy_visual_encoder(image, patch_embed_w, cls_token,
                                              layer_ws)
    ref = adapter_reference(image_embeds, hidden, w_down, w_up)
    assert out.shape == (B, S, D)
    assert jnp.allclose(out, ref, atol=1e-2, rtol=1e-2)

    print("KERNEL_OK")
</pallas_src>

<mosaic_0001>
module attributes {stable_mosaic.version = 11 : i64} {
  func.func @_adapter_kernel(%arg0: i32, %arg1: memref<32x128xf32, #tpu.memory_space<vmem>>, %arg2: memref<32x128xf32, #tpu.memory_space<vmem>>, %arg3: memref<32x128xf32, #tpu.memory_space<vmem>>, %arg4: memref<32x128xf32, #tpu.memory_space<vmem>>, %arg5: memref<32x128xf32, #tpu.memory_space<vmem>>, %arg6: memref<4x128x64xbf16, #tpu.memory_space<vmem>>, %arg7: memref<4x64x128xbf16, #tpu.memory_space<vmem>>, %arg8: memref<32x128xf32, #tpu.memory_space<vmem>>) attributes {dimension_semantics = [#tpu.dimension_semantics<parallel>], iteration_bounds = array<i64: 2>, scalar_prefetch = 0 : i64, scratch_operands = 0 : i64, tpu.core_type = #tpu.core_type<tc>, window_params = [{transform_indices = @transform_0, window_bounds = array<i64: 32, 128>}, {transform_indices = @transform_1, window_bounds = array<i64: 32, 128>}, {transform_indices = @transform_2, window_bounds = array<i64: 32, 128>}, {transform_indices = @transform_3, window_bounds = array<i64: 32, 128>}, {transform_indices = @transform_4, window_bounds = array<i64: 32, 128>}, {pipeline_mode = #tpu.pipeline_mode<synchronous>, transform_indices = @transform_5, window_bounds = array<i64: 4, 128, 64>}, {pipeline_mode = #tpu.pipeline_mode<synchronous>, transform_indices = @transform_6, window_bounds = array<i64: 4, 64, 128>}, {transform_indices = @transform_7, window_bounds = array<i64: 32, 128>}]} {
    %c0 = arith.constant 0 : index
    %c0_0 = arith.constant 0 : index
    %0 = vector.load %arg2[%c0, %c0_0] : memref<32x128xf32, #tpu.memory_space<vmem>>, vector<32x128xf32>
    %1 = arith.truncf %0 : vector<32x128xf32> to vector<32x128xbf16>
    %c0_1 = arith.constant 0 : index
    %c0_2 = arith.constant 0 : index
    %c0_3 = arith.constant 0 : index
    %2 = vector.load %arg6[%c0_1, %c0_2, %c0_3] : memref<4x128x64xbf16, #tpu.memory_space<vmem>>, vector<1x128x64xbf16>
    %3 = vector.shape_cast %2 : vector<1x128x64xbf16> to vector<128x64xbf16>
    %cst = arith.constant dense<0.000000e+00> : vector<32x64xf32>
    %4 = tpu.matmul %1, %3, %cst {dimension_numbers = #tpu.dot_dimension_numbers<[1], [0], [0], [1], [0, 0, 1, 1], [], []>} : vector<32x128xbf16>, vector<128x64xbf16>, vector<32x64xf32> -> vector<32x64xf32>
    %cst_4 = arith.constant 0.000000e+00 : f32
    %5 = vector.broadcast %cst_4 : f32 to vector<32x64xf32>
    %6 = arith.maximumf %4, %5 : vector<32x64xf32>
    %7 = arith.truncf %6 : vector<32x64xf32> to vector<32x64xbf16>
    %c0_5 = arith.constant 0 : index
    %c0_6 = arith.constant 0 : index
    %c0_7 = arith.constant 0 : index
    %8 = vector.load %arg7[%c0_5, %c0_6, %c0_7] : memref<4x64x128xbf16, #tpu.memory_space<vmem>>, vector<1x64x128xbf16>
    %9 = vector.shape_cast %8 : vector<1x64x128xbf16> to vector<64x128xbf16>
    %cst_8 = arith.constant dense<0.000000e+00> : vector<32x128xf32>
    %10 = tpu.matmul %7, %9, %cst_8 {dimension_numbers = #tpu.dot_dimension_numbers<[1], [0], [0], [1], [0, 0, 1, 1], [], []>} : vector<32x64xbf16>, vector<64x128xbf16>, vector<32x128xf32> -> vector<32x128xf32>
    %c0_9 = arith.constant 0 : index
    %c0_10 = arith.constant 0 : index
    %11 = vector.load %arg3[%c0_9, %c0_10] : memref<32x128xf32, #tpu.memory_space<vmem>>, vector<32x128xf32>
    %12 = arith.truncf %11 : vector<32x128xf32> to vector<32x128xbf16>
    %c1 = arith.constant 1 : index
    %c0_11 = arith.constant 0 : index
    %c0_12 = arith.constant 0 : index
    %13 = vector.load %arg6[%c1, %c0_11, %c0_12] : memref<4x128x64xbf16, #tpu.memory_space<vmem>>, vector<1x128x64xbf16>
    %14 = vector.shape_cast %13 : vector<1x128x64xbf16> to vector<128x64xbf16>
    %cst_13 = arith.constant dense<0.000000e+00> : vector<32x64xf32>
    %15 = tpu.matmul %12, %14, %cst_13 {dimension_numbers = #tpu.dot_dimension_numbers<[1], [0], [0], [1], [0, 0, 1, 1], [], []>} : vector<32x128xbf16>, vector<128x64xbf16>, vector<32x64xf32> -> vector<32x64xf32>
    %cst_14 = arith.constant 0.000000e+00 : f32
    %16 = vector.broadcast %cst_14 : f32 to vector<32x64xf32>
    %17 = arith.maximumf %15, %16 : vector<32x64xf32>
    %18 = arith.truncf %17 : vector<32x64xf32> to vector<32x64xbf16>
    %c1_15 = arith.constant 1 : index
    %c0_16 = arith.constant 0 : index
    %c0_17 = arith.constant 0 : index
    %19 = vector.load %arg7[%c1_15, %c0_16, %c0_17] : memref<4x64x128xbf16, #tpu.memory_space<vmem>>, vector<1x64x128xbf16>
    %20 = vector.shape_cast %19 : vector<1x64x128xbf16> to vector<64x128xbf16>
    %cst_18 = arith.constant dense<0.000000e+00> : vector<32x128xf32>
    %21 = tpu.matmul %18, %20, %cst_18 {dimension_numbers = #tpu.dot_dimension_numbers<[1], [0], [0], [1], [0, 0, 1, 1], [], []>} : vector<32x64xbf16>, vector<64x128xbf16>, vector<32x128xf32> -> vector<32x128xf32>
    %22 = arith.addf %10, %21 : vector<32x128xf32>
    %c0_19 = arith.constant 0 : index
    %c0_20 = arith.constant 0 : index
    %23 = vector.load %arg4[%c0_19, %c0_20] : memref<32x128xf32, #tpu.memory_space<vmem>>, vector<32x128xf32>
    %24 = arith.truncf %23 : vector<32x128xf32> to vector<32x128xbf16>
    %c2 = arith.constant 2 : index
    %c0_21 = arith.constant 0 : index
    %c0_22 = arith.constant 0 : index
    %25 = vector.load %arg6[%c2, %c0_21, %c0_22] : memref<4x128x64xbf16, #tpu.memory_space<vmem>>, vector<1x128x64xbf16>
    %26 = vector.shape_cast %25 : vector<1x128x64xbf16> to vector<128x64xbf16>
    %cst_23 = arith.constant dense<0.000000e+00> : vector<32x64xf32>
    %27 = tpu.matmul %24, %26, %cst_23 {dimension_numbers = #tpu.dot_dimension_numbers<[1], [0], [0], [1], [0, 0, 1, 1], [], []>} : vector<32x128xbf16>, vector<128x64xbf16>, vector<32x64xf32> -> vector<32x64xf32>
    %cst_24 = arith.constant 0.000000e+00 : f32
    %28 = vector.broadcast %cst_24 : f32 to vector<32x64xf32>
    %29 = arith.maximumf %27, %28 : vector<32x64xf32>
    %30 = arith.truncf %29 : vector<32x64xf32> to vector<32x64xbf16>
    %c2_25 = arith.constant 2 : index
    %c0_26 = arith.constant 0 : index
    %c0_27 = arith.constant 0 : index
    %31 = vector.load %arg7[%c2_25, %c0_26, %c0_27] : memref<4x64x128xbf16, #tpu.memory_space<vmem>>, vector<1x64x128xbf16>
    %32 = vector.shape_cast %31 : vector<1x64x128xbf16> to vector<64x128xbf16>
    %cst_28 = arith.constant dense<0.000000e+00> : vector<32x128xf32>
    %33 = tpu.matmul %30, %32, %cst_28 {dimension_numbers = #tpu.dot_dimension_numbers<[1], [0], [0], [1], [0, 0, 1, 1], [], []>} : vector<32x64xbf16>, vector<64x128xbf16>, vector<32x128xf32> -> vector<32x128xf32>
    %34 = arith.addf %22, %33 : vector<32x128xf32>
    %c0_29 = arith.constant 0 : index
    %c0_30 = arith.constant 0 : index
    %35 = vector.load %arg5[%c0_29, %c0_30] : memref<32x128xf32, #tpu.memory_space<vmem>>, vector<32x128xf32>
    %36 = arith.truncf %35 : vector<32x128xf32> to vector<32x128xbf16>
    %c3 = arith.constant 3 : index
    %c0_31 = arith.constant 0 : index
    %c0_32 = arith.constant 0 : index
    %37 = vector.load %arg6[%c3, %c0_31, %c0_32] : memref<4x128x64xbf16, #tpu.memory_space<vmem>>, vector<1x128x64xbf16>
    %38 = vector.shape_cast %37 : vector<1x128x64xbf16> to vector<128x64xbf16>
    %cst_33 = arith.constant dense<0.000000e+00> : vector<32x64xf32>
    %39 = tpu.matmul %36, %38, %cst_33 {dimension_numbers = #tpu.dot_dimension_numbers<[1], [0], [0], [1], [0, 0, 1, 1], [], []>} : vector<32x128xbf16>, vector<128x64xbf16>, vector<32x64xf32> -> vector<32x64xf32>
    %cst_34 = arith.constant 0.000000e+00 : f32
    %40 = vector.broadcast %cst_34 : f32 to vector<32x64xf32>
    %41 = arith.maximumf %39, %40 : vector<32x64xf32>
    %42 = arith.truncf %41 : vector<32x64xf32> to vector<32x64xbf16>
    %c3_35 = arith.constant 3 : index
    %c0_36 = arith.constant 0 : index
    %c0_37 = arith.constant 0 : index
    %43 = vector.load %arg7[%c3_35, %c0_36, %c0_37] : memref<4x64x128xbf16, #tpu.memory_space<vmem>>, vector<1x64x128xbf16>
    %44 = vector.shape_cast %43 : vector<1x64x128xbf16> to vector<64x128xbf16>
    %cst_38 = arith.constant dense<0.000000e+00> : vector<32x128xf32>
    %45 = tpu.matmul %42, %44, %cst_38 {dimension_numbers = #tpu.dot_dimension_numbers<[1], [0], [0], [1], [0, 0, 1, 1], [], []>} : vector<32x64xbf16>, vector<64x128xbf16>, vector<32x128xf32> -> vector<32x128xf32>
    %46 = arith.addf %34, %45 : vector<32x128xf32>
    %cst_39 = arith.constant 0.000000e+00 : f32
    %47 = vector.broadcast %cst_39 : f32 to vector<32x128xf32>
    %48 = arith.maximumf %46, %47 : vector<32x128xf32>
    %c0_40 = arith.constant 0 : index
    %c0_41 = arith.constant 0 : index
    %49 = vector.load %arg1[%c0_40, %c0_41] : memref<32x128xf32, #tpu.memory_space<vmem>>, vector<32x128xf32>
    %50 = arith.addf %49, %48 : vector<32x128xf32>
    %c0_42 = arith.constant 0 : index
    %c0_43 = arith.constant 0 : index
    %51 = vector.load %arg8[%c0_42, %c0_43] : memref<32x128xf32, #tpu.memory_space<vmem>>, vector<32x128xf32>
    tpu.vector_store %arg8[%c0_42, %c0_43], %50 {strides = array<i32>} : memref<32x128xf32, #tpu.memory_space<vmem>>, vector<32x128xf32>,
    return
  }
  func.func @transform_0(%arg0: i32) -> (i32, i32) {
    %c0_i32 = arith.constant 0 : i32
    %c0_i32_0 = arith.constant 0 : i32
    return %arg0, %c0_i32 : i32, i32
  }
  func.func @transform_1(%arg0: i32) -> (i32, i32) {
    %c0_i32 = arith.constant 0 : i32
    %c0_i32_0 = arith.constant 0 : i32
    return %arg0, %c0_i32 : i32, i32
  }
  func.func @transform_2(%arg0: i32) -> (i32, i32) {
    %c0_i32 = arith.constant 0 : i32
    %c0_i32_0 = arith.constant 0 : i32
    return %arg0, %c0_i32 : i32, i32
  }
  func.func @transform_3(%arg0: i32) -> (i32, i32) {
    %c0_i32 = arith.constant 0 : i32
    %c0_i32_0 = arith.constant 0 : i32
    return %arg0, %c0_i32 : i32, i32
  }
  func.func @transform_4(%arg0: i32) -> (i32, i32) {
    %c0_i32 = arith.constant 0 : i32
    %c0_i32_0 = arith.constant 0 : i32
    return %arg0, %c0_i32 : i32, i32
  }
  func.func @transform_5(%arg0: i32) -> (i32, i32, i32) {
    %c0_i32 = arith.constant 0 : i32
    %c0_i32_0 = arith.constant 0 : i32
    %c0_i32_1 = arith.constant 0 : i32
    %c0_i32_2 = arith.constant 0 : i32
    return %c0_i32, %c0_i32_0, %c0_i32_1 : i32, i32, i32
  }
  func.func @transform_6(%arg0: i32) -> (i32, i32, i32) {
    %c0_i32 = arith.constant 0 : i32
    %c0_i32_0 = arith.constant 0 : i32
    %c0_i32_1 = arith.constant 0 : i32
    %c0_i32_2 = arith.constant 0 : i32
    return %c0_i32, %c0_i32_0, %c0_i32_1 : i32, i32, i32
  }
  func.func @transform_7(%arg0: i32) -> (i32, i32) {
    %c0_i32 = arith.constant 0 : i32
    %c0_i32_0 = arith.constant 0 : i32
    return %arg0, %c0_i32 : i32, i32
  }
}

module attributes {stable_mosaic.version = 11 : i64} {
  func.func @_adapter_kernel(%arg0: i32, %arg1: memref<32x128xf32, #tpu.memory_space<vmem>>, %arg2: memref<32x128xf32, #tpu.memory_space<vmem>>, %arg3: memref<32x128xf32, #tpu.memory_space<vmem>>, %arg4: memref<32x128xf32, #tpu.memory_space<vmem>>, %arg5: memref<32x128xf32, #tpu.memory_space<vmem>>, %arg6: memref<4x128x64xbf16, #tpu.memory_space<vmem>>, %arg7: memref<4x64x128xbf16, #tpu.memory_space<vmem>>, %arg8: memref<32x128xf32, #tpu.memory_space<vmem>>) attributes {dimension_semantics = [#tpu.dimension_semantics<parallel>], iteration_bounds = array<i64: 2>, scalar_prefetch = 0 : i64, scratch_operands = 0 : i64, tpu.core_type = #tpu.core_type<tc>, window_params = [{transform_indices = @transform_0, window_bounds = array<i64: 32, 128>}, {transform_indices = @transform_1, window_bounds = array<i64: 32, 128>}, {transform_indices = @transform_2, window_bounds = array<i64: 32, 128>}, {transform_indices = @transform_3, window_bounds = array<i64: 32, 128>}, {transform_indices = @transform_4, window_bounds = array<i64: 32, 128>}, {pipeline_mode = #tpu.pipeline_mode<synchronous>, transform_indices = @transform_5, window_bounds = array<i64: 4, 128, 64>}, {pipeline_mode = #tpu.pipeline_mode<synchronous>, transform_indices = @transform_6, window_bounds = array<i64: 4, 64, 128>}, {transform_indices = @transform_7, window_bounds = array<i64: 32, 128>}]} {
    %c0 = arith.constant 0 : index
    %c0_0 = arith.constant 0 : index
    %0 = vector.load %arg2[%c0, %c0_0] : memref<32x128xf32, #tpu.memory_space<vmem>>, vector<32x128xf32>
    %1 = arith.truncf %0 : vector<32x128xf32> to vector<32x128xbf16>
    %c0_1 = arith.constant 0 : index
    %c0_2 = arith.constant 0 : index
    %c0_3 = arith.constant 0 : index
    %2 = vector.load %arg6[%c0_1, %c0_2, %c0_3] : memref<4x128x64xbf16, #tpu.memory_space<vmem>>, vector<1x128x64xbf16>
    %3 = vector.shape_cast %2 : vector<1x128x64xbf16> to vector<128x64xbf16>
    %cst = arith.constant dense<0.000000e+00> : vector<32x64xf32>
    %4 = tpu.matmul %1, %3, %cst {dimension_numbers = #tpu.dot_dimension_numbers<[1], [0], [0], [1], [0, 0, 1, 1], [], []>} : vector<32x128xbf16>, vector<128x64xbf16>, vector<32x64xf32> -> vector<32x64xf32>
    %cst_4 = arith.constant 0.000000e+00 : f32
    %5 = vector.broadcast %cst_4 : f32 to vector<32x64xf32>
    %6 = arith.maximumf %4, %5 : vector<32x64xf32>
    %7 = arith.truncf %6 : vector<32x64xf32> to vector<32x64xbf16>
    %c0_5 = arith.constant 0 : index
    %c0_6 = arith.constant 0 : index
    %c0_7 = arith.constant 0 : index
    %8 = vector.load %arg7[%c0_5, %c0_6, %c0_7] : memref<4x64x128xbf16, #tpu.memory_space<vmem>>, vector<1x64x128xbf16>
    %9 = vector.shape_cast %8 : vector<1x64x128xbf16> to vector<64x128xbf16>
    %cst_8 = arith.constant dense<0.000000e+00> : vector<32x128xf32>
    %10 = tpu.matmul %7, %9, %cst_8 {dimension_numbers = #tpu.dot_dimension_numbers<[1], [0], [0], [1], [0, 0, 1, 1], [], []>} : vector<32x64xbf16>, vector<64x128xbf16>, vector<32x128xf32> -> vector<32x128xf32>
    %c0_9 = arith.constant 0 : index
    %c0_10 = arith.constant 0 : index
    %11 = vector.load %arg3[%c0_9, %c0_10] : memref<32x128xf32, #tpu.memory_space<vmem>>, vector<32x128xf32>
    %12 = arith.truncf %11 : vector<32x128xf32> to vector<32x128xbf16>
    %c1 = arith.constant 1 : index
    %c0_11 = arith.constant 0 : index
    %c0_12 = arith.constant 0 : index
    %13 = vector.load %arg6[%c1, %c0_11, %c0_12] : memref<4x128x64xbf16, #tpu.memory_space<vmem>>, vector<1x128x64xbf16>
    %14 = vector.shape_cast %13 : vector<1x128x64xbf16> to vector<128x64xbf16>
    %cst_13 = arith.constant dense<0.000000e+00> : vector<32x64xf32>
    %15 = tpu.matmul %12, %14, %cst_13 {dimension_numbers = #tpu.dot_dimension_numbers<[1], [0], [0], [1], [0, 0, 1, 1], [], []>} : vector<32x128xbf16>, vector<128x64xbf16>, vector<32x64xf32> -> vector<32x64xf32>
    %cst_14 = arith.constant 0.000000e+00 : f32
    %16 = vector.broadcast %cst_14 : f32 to vector<32x64xf32>
    %17 = arith.maximumf %15, %16 : vector<32x64xf32>
    %18 = arith.truncf %17 : vector<32x64xf32> to vector<32x64xbf16>
    %c1_15 = arith.constant 1 : index
    %c0_16 = arith.constant 0 : index
    %c0_17 = arith.constant 0 : index
    %19 = vector.load %arg7[%c1_15, %c0_16, %c0_17] : memref<4x64x128xbf16, #tpu.memory_space<vmem>>, vector<1x64x128xbf16>
    %20 = vector.shape_cast %19 : vector<1x64x128xbf16> to vector<64x128xbf16>
    %cst_18 = arith.constant dense<0.000000e+00> : vector<32x128xf32>
    %21 = tpu.matmul %18, %20, %cst_18 {dimension_numbers = #tpu.dot_dimension_numbers<[1], [0], [0], [1], [0, 0, 1, 1], [], []>} : vector<32x64xbf16>, vector<64x128xbf16>, vector<32x128xf32> -> vector<32x128xf32>
    %22 = arith.addf %10, %21 : vector<32x128xf32>
    %c0_19 = arith.constant 0 : index
    %c0_20 = arith.constant 0 : index
    %23 = vector.load %arg4[%c0_19, %c0_20] : memref<32x128xf32, #tpu.memory_space<vmem>>, vector<32x128xf32>
    %24 = arith.truncf %23 : vector<32x128xf32> to vector<32x128xbf16>
    %c2 = arith.constant 2 : index
    %c0_21 = arith.constant 0 : index
    %c0_22 = arith.constant 0 : index
    %25 = vector.load %arg6[%c2, %c0_21, %c0_22] : memref<4x128x64xbf16, #tpu.memory_space<vmem>>, vector<1x128x64xbf16>
    %26 = vector.shape_cast %25 : vector<1x128x64xbf16> to vector<128x64xbf16>
    %cst_23 = arith.constant dense<0.000000e+00> : vector<32x64xf32>
    %27 = tpu.matmul %24, %26, %cst_23 {dimension_numbers = #tpu.dot_dimension_numbers<[1], [0], [0], [1], [0, 0, 1, 1], [], []>} : vector<32x128xbf16>, vector<128x64xbf16>, vector<32x64xf32> -> vector<32x64xf32>
    %cst_24 = arith.constant 0.000000e+00 : f32
    %28 = vector.broadcast %cst_24 : f32 to vector<32x64xf32>
    %29 = arith.maximumf %27, %28 : vector<32x64xf32>
    %30 = arith.truncf %29 : vector<32x64xf32> to vector<32x64xbf16>
    %c2_25 = arith.constant 2 : index
    %c0_26 = arith.constant 0 : index
    %c0_27 = arith.constant 0 : index
    %31 = vector.load %arg7[%c2_25, %c0_26, %c0_27] : memref<4x64x128xbf16, #tpu.memory_space<vmem>>, vector<1x64x128xbf16>
    %32 = vector.shape_cast %31 : vector<1x64x128xbf16> to vector<64x128xbf16>
    %cst_28 = arith.constant dense<0.000000e+00> : vector<32x128xf32>
    %33 = tpu.matmul %30, %32, %cst_28 {dimension_numbers = #tpu.dot_dimension_numbers<[1], [0], [0], [1], [0, 0, 1, 1], [], []>} : vector<32x64xbf16>, vector<64x128xbf16>, vector<32x128xf32> -> vector<32x128xf32>
    %34 = arith.addf %22, %33 : vector<32x128xf32>
    %c0_29 = arith.constant 0 : index
    %c0_30 = arith.constant 0 : index
    %35 = vector.load %arg5[%c0_29, %c0_30] : memref<32x128xf32, #tpu.memory_space<vmem>>, vector<32x128xf32>
    %36 = arith.truncf %35 : vector<32x128xf32> to vector<32x128xbf16>
    %c3 = arith.constant 3 : index
    %c0_31 = arith.constant 0 : index
    %c0_32 = arith.constant 0 : index
    %37 = vector.load %arg6[%c3, %c0_31, %c0_32] : memref<4x128x64xbf16, #tpu.memory_space<vmem>>, vector<1x128x64xbf16>
    %38 = vector.shape_cast %37 : vector<1x128x64xbf16> to vector<128x64xbf16>
    %cst_33 = arith.constant dense<0.000000e+00> : vector<32x64xf32>
    %39 = tpu.matmul %36, %38, %cst_33 {dimension_numbers = #tpu.dot_dimension_numbers<[1], [0], [0], [1], [0, 0, 1, 1], [], []>} : vector<32x128xbf16>, vector<128x64xbf16>, vector<32x64xf32> -> vector<32x64xf32>
    %cst_34 = arith.constant 0.000000e+00 : f32
    %40 = vector.broadcast %cst_34 : f32 to vector<32x64xf32>
    %41 = arith.maximumf %39, %40 : vector<32x64xf32>
    %42 = arith.truncf %41 : vector<32x64xf32> to vector<32x64xbf16>
    %c3_35 = arith.constant 3 : index
    %c0_36 = arith.constant 0 : index
    %c0_37 = arith.constant 0 : index
    %43 = vector.load %arg7[%c3_35, %c0_36, %c0_37] : memref<4x64x128xbf16, #tpu.memory_space<vmem>>, vector<1x64x128xbf16>
    %44 = vector.shape_cast %43 : vector<1x64x128xbf16> to vector<64x128xbf16>
    %cst_38 = arith.constant dense<0.000000e+00> : vector<32x128xf32>
    %45 = tpu.matmul %42, %44, %cst_38 {dimension_numbers = #tpu.dot_dimension_numbers<[1], [0], [0], [1], [0, 0, 1, 1], [], []>} : vector<32x64xbf16>, vector<64x128xbf16>, vector<32x128xf32> -> vector<32x128xf32>
    %46 = arith.addf %34, %45 : vector<32x128xf32>
    %cst_39 = arith.constant 0.000000e+00 : f32
    %47 = vector.broadcast %cst_39 : f32 to vector<32x128xf32>
    %48 = arith.maximumf %46, %47 : vector<32x128xf32>
    %c0_40 = arith.constant 0 : index
    %c0_41 = arith.constant 0 : index
    %49 = vector.load %arg1[%c0_40, %c0_41] : memref<32x128xf32, #tpu.memory_space<vmem>>, vector<32x128xf32>
    %50 = arith.addf %49, %48 : vector<32x128xf32>
    %c0_42 = arith.constant 0 : index
    %c0_43 = arith.constant 0 : index
    %51 = vector.load %arg8[%c0_42, %c0_43] : memref<32x128xf32, #tpu.memory_space<vmem>>, vector<32x128xf32>
    tpu.vector_store %arg8[%c0_42, %c0_43], %50 {strides = array<i32>} : memref<32x128xf32, #tpu.memory_space<vmem>>, vector<32x128xf32>,
    return
  }
  func.func @transform_0(%arg0: i32) -> (i32, i32) {
    %c0_i32 = arith.constant 0 : i32
    %c0_i32_0 = arith.constant 0 : i32
    return %arg0, %c0_i32 : i32, i32
  }
  func.func @transform_1(%arg0: i32) -> (i32, i32) {
    %c0_i32 = arith.constant 0 : i32
    %c0_i32_0 = arith.constant 0 : i32
    return %arg0, %c0_i32 : i32, i32
  }
  func.func @transform_2(%arg0: i32) -> (i32, i32) {
    %c0_i32 = arith.constant 0 : i32
    %c0_i32_0 = arith.constant 0 : i32
    return %arg0, %c0_i32 : i32, i32
  }
  func.func @transform_3(%arg0: i32) -> (i32, i32) {
    %c0_i32 = arith.constant 0 : i32
    %c0_i32_0 = arith.constant 0 : i32
    return %arg0, %c0_i32 : i32, i32
  }
  func.func @transform_4(%arg0: i32) -> (i32, i32) {
    %c0_i32 = arith.constant 0 : i32
    %c0_i32_0 = arith.constant 0 : i32
    return %arg0, %c0_i32 : i32, i32
  }
  func.func @transform_5(%arg0: i32) -> (i32, i32, i32) {
    %c0_i32 = arith.constant 0 : i32
    %c0_i32_0 = arith.constant 0 : i32
    %c0_i32_1 = arith.constant 0 : i32
    %c0_i32_2 = arith.constant 0 : i32
    return %c0_i32, %c0_i32_0, %c0_i32_1 : i32, i32, i32
  }
  func.func @transform_6(%arg0: i32) -> (i32, i32, i32) {
    %c0_i32 = arith.constant 0 : i32
    %c0_i32_0 = arith.constant 0 : i32
    %c0_i32_1 = arith.constant 0 : i32
    %c0_i32_2 = arith.constant 0 : i32
    return %c0_i32, %c0_i32_0, %c0_i32_1 : i32, i32, i32
  }
  func.func @transform_7(%arg0: i32) -> (i32, i32) {
    %c0_i32 = arith.constant 0 : i32
    %c0_i32_0 = arith.constant 0 : i32
    return %arg0, %c0_i32 : i32, i32
  }
}

</mosaic_0001>

<llo_original>
// kernel: tpu_custom_call.1
$region0: #{tpu_custom_call.1}
  #allocation0 [shape = 'u32[]', space=smem, size = 0x4, offset = 0x4, fixed_abs, tag = 'smem constant byte address 0x4 - core index']
  #allocation1 [shape = 'u32[72,128]{1,0:T(1,128)}', space=vmem, size = 0x9000, scoped, tag = 'internal scratch']
  %s0 = inlined_call_operand.vmem [shape: f32[34,128], index: 0, kind: input, shape index: {}]
  %s1 = inlined_call_operand.vmem [shape: f32[34,128], index: 1, kind: input, shape index: {}]
  %s2 = inlined_call_operand.vmem [shape: f32[34,128], index: 2, kind: input, shape index: {}]
  %s3 = inlined_call_operand.vmem [shape: f32[34,128], index: 3, kind: input, shape index: {}]
  %s4 = inlined_call_operand.vmem [shape: f32[34,128], index: 4, kind: input, shape index: {}]
  %s5 = inlined_call_operand.vmem [shape: bf16[4,128,64], index: 5, kind: input, shape index: {}]
  %s6 = inlined_call_operand.vmem [shape: bf16[4,64,128], index: 6, kind: input, shape index: {}]
  %s7 = inlined_call_operand.hbm [shape: f32[34,128], index: 7, kind: output, shape index: {}]
  %s8 = sld [smem:[#allocation0]]
  $region61: #{tpu_custom_call.1} parent=0
    _
  %s10 = ssub.s32 1, %s8
  %s11 = scalar_select 0, %s10, %s8
  $region1: #{tpu_custom_call.1} parent=0
    #allocation2 [shape = 'u8[32768]{0}', space=vmem, size = 0x8000, scoped, tag = 'output window, operand 0']
    #allocation3 [shape = 's32[2]{0}', space=sflag, size = 0x8, scoped, tag = 'scoped memory for tpu_custom_call.1']
    %12 = vsyncpa [#allocation3], 0
    %s13 = scalar_lea.sflag [#allocation3], 1
    %14 = vsyncpa %s13, 0
    loop: start=0, step=1, limit=4
    $region2: #{tpu_custom_call.1} parent=1 // loop_pre_header
      _
    $region3: #{tpu_custom_call.1} parent=1 // loop_header
      %s16 = sphi 0, %s20
      %p17 = scmp.ge.s32.totalorder %s16, 4
      %s26 = sphi 0, %s28
      %s29 = sphi 0, %s26
      %s30 = sphi 0, %s29
      %s46 = sphi 0, %s30
      %s52 = sphi 0, %s54
      %s55 = sphi 0, %s52
      %s56 = sphi 0, %s55
      %s72 = sphi 0, %s56
      %s78 = sphi 0, %s80
      %s81 = sphi 0, %s78
      %s82 = sphi 0, %s81
      %s98 = sphi 0, %s82
      %s104 = sphi 0, %s106
      %s107 = sphi 0, %s104
      %s108 = sphi 0, %s107
      %s124 = sphi 0, %s108
      %s130 = sphi 0, %s132
      %s133 = sphi 0, %s130
      %s134 = sphi 0, %s133
      %s150 = sphi 0, %s134
      %s154 = sphi 0, %s154
      %s156 = sphi 0, %s154
      %s157 = sphi 0, %s156
      %s171 = sphi 0, %s157
      %s175 = sphi 0, %s175
      %s177 = sphi 0, %s175
      %s178 = sphi 0, %s177
      %s192 = sphi 0, %s178
      %s198 = sphi 0, %s200
      %s201 = sphi 0, %s198
      %s202 = sphi 0, %s201
      %s218 = sphi 0, %s202
    $region4: #{tpu_custom_call.1} parent=1 // loop_header_branch
      %19 = sbr.rel (%p17) target = $region8
    $region5: #{tpu_custom_call.1} parent=1 // loop_body
      %s21 = ssub.s32 %s16, 1
      %s22 = ssub.s32 %s16, 2
      %s23 = sadd.s32 %s16, 1
      %s24 = ssub.s32 %s16, %s23
      %p25 = scmp.eq.s32.totalorder %s24, 0
      %s27 = sadd.s32 %s26, 1
      %s28 = scalar_select %p25, %s26, %s27
      %p31 = pneg %p25
      %p32 = scmp.eq.s32.totalorder %s16, 1
      %p33 = por %p31, %p32
      %p34 = scmp.ne.s32.totalorder %s26, %s29
      %p35 = scmp.eq.s32.totalorder %s16, 0
      %p36 = por %p34, %p35
      %p37 = scmp.ne.s32.totalorder %s26, %s29
      %p38 = scmp.eq.s32.totalorder %s21, 1
      %p39 = por %p37, %p38
      %p40 = scmp.ne.s32.totalorder %s29, %s30
      %p41 = scmp.eq.s32.totalorder %s21, 0
      %p42 = por %p40, %p41
      %p43 = scmp.ne.s32.totalorder %s29, %s30
      %p44 = scmp.eq.s32.totalorder %s22, 1
      %p45 = por %p43, %p44
      %p47 = scmp.ne.s32.totalorder %s30, %s46
      %p48 = scmp.eq.s32.totalorder %s22, 0
      %p49 = por %p47, %p48
      %s50 = ssub.s32 %s16, %s23
      %p51 = scmp.eq.s32.totalorder %s50, 0
      %s53 = sadd.s32 %s52, 1
      %s54 = scalar_select %p51, %s52, %s53
      %p57 = pneg %p51
      %p58 = scmp.eq.s32.totalorder %s16, 1
      %p59 = por %p57, %p58
      %p60 = scmp.ne.s32.totalorder %s52, %s55
      %p61 = scmp.eq.s32.totalorder %s16, 0
      %p62 = por %p60, %p61
      %p63 = scmp.ne.s32.totalorder %s52, %s55
      %p64 = scmp.eq.s32.totalorder %s21, 1
      %p65 = por %p63, %p64
      %p66 = scmp.ne.s32.totalorder %s55, %s56
      %p67 = scmp.eq.s32.totalorder %s21, 0
      %p68 = por %p66, %p67
      %p69 = scmp.ne.s32.totalorder %s55, %s56
      %p70 = scmp.eq.s32.totalorder %s22, 1
      %p71 = por %p69, %p70
      %p73 = scmp.ne.s32.totalorder %s56, %s72
      %p74 = scmp.eq.s32.totalorder %s22, 0
      %p75 = por %p73, %p74
      %s76 = ssub.s32 %s16, %s23
      %p77 = scmp.eq.s32.totalorder %s76, 0
      %s79 = sadd.s32 %s78, 1
      %s80 = scalar_select %p77, %s78, %s79
      %p83 = pneg %p77
      %p84 = scmp.eq.s32.totalorder %s16, 1
      %p85 = por %p83, %p84
      %p86 = scmp.ne.s32.totalorder %s78, %s81
      %p87 = scmp.eq.s32.totalorder %s16, 0
      %p88 = por %p86, %p87
      %p89 = scmp.ne.s32.totalorder %s78, %s81
      %p90 = scmp.eq.s32.totalorder %s21, 1
      %p91 = por %p89, %p90
      %p92 = scmp.ne.s32.totalorder %s81, %s82
      %p93 = scmp.eq.s32.totalorder %s21, 0
      %p94 = por %p92, %p93
      %p95 = scmp.ne.s32.totalorder %s81, %s82
      %p96 = scmp.eq.s32.totalorder %s22, 1
      %p97 = por %p95, %p96
      %p99 = scmp.ne.s32.totalorder %s82, %s98
      %p100 = scmp.eq.s32.totalorder %s22, 0
      %p101 = por %p99, %p100
      %s102 = ssub.s32 %s16, %s23
      %p103 = scmp.eq.s32.totalorder %s102, 0
      %s105 = sadd.s32 %s104, 1
      %s106 = scalar_select %p103, %s104, %s105
      %p109 = pneg %p103
      %p110 = scmp.eq.s32.totalorder %s16, 1
      %p111 = por %p109, %p110
      %p112 = scmp.ne.s32.totalorder %s104, %s107
      %p113 = scmp.eq.s32.totalorder %s16, 0
      %p114 = por %p112, %p113
      %p115 = scmp.ne.s32.totalorder %s104, %s107
      %p116 = scmp.eq.s32.totalorder %s21, 1
      %p117 = por %p115, %p116
      %p118 = scmp.ne.s32.totalorder %s107, %s108
      %p119 = scmp.eq.s32.totalorder %s21, 0
      %p120 = por %p118, %p119
      %p121 = scmp.ne.s32.totalorder %s107, %s108
      %p122 = scmp.eq.s32.totalorder %s22, 1
      %p123 = por %p121, %p122
      %p125 = scmp.ne.s32.totalorder %s108, %s124
      %p126 = scmp.eq.s32.totalorder %s22, 0
      %p127 = por %p125, %p126
      %s128 = ssub.s32 %s16, %s23
      %p129 = scmp.eq.s32.totalorder %s128, 0
      %s131 = sadd.s32 %s130, 1
      %s132 = scalar_select %p129, %s130, %s131
      %p135 = pneg %p129
      %p136 = scmp.eq.s32.totalorder %s16, 1
      %p137 = por %p135, %p136
      %p138 = scmp.ne.s32.totalorder %s130, %s133
      %p139 = scmp.eq.s32.totalorder %s16, 0
      %p140 = por %p138, %p139
      %p141 = scmp.ne.s32.totalorder %s130, %s133
      %p142 = scmp.eq.s32.totalorder %s21, 1
      %p143 = por %p141, %p142
      %p144 = scmp.ne.s32.totalorder %s133, %s134
      %p145 = scmp.eq.s32.totalorder %s21, 0
      %p146 = por %p144, %p145
      %p147 = scmp.ne.s32.totalorder %s133, %s134
      %p148 = scmp.eq.s32.totalorder %s22, 1
      %p149 = por %p147, %p148
      %p151 = scmp.ne.s32.totalorder %s134, %s150
      %p152 = scmp.eq.s32.totalorder %s22, 0
      %p153 = por %p151, %p152
      %s155 = sadd.s32 %s154, 1
      %p158 = scmp.eq.s32.totalorder %s16, 1
      %p159 = scmp.ne.s32.totalorder %s154, %s156
      %p160 = scmp.eq.s32.totalorder %s16, 0
      %p161 = por %p159, %p160
      %p162 = scmp.ne.s32.totalorder %s154, %s156
      %p163 = scmp.eq.s32.totalorder %s21, 1
      %p164 = por %p162, %p163
      %p165 = scmp.ne.s32.totalorder %s156, %s157
      %p166 = scmp.eq.s32.totalorder %s21, 0
      %p167 = por %p165, %p166
      %p168 = scmp.ne.s32.totalorder %s156, %s157
      %p169 = scmp.eq.s32.totalorder %s22, 1
      %p170 = por %p168, %p169
      %p172 = scmp.ne.s32.totalorder %s157, %s171
      %p173 = scmp.eq.s32.totalorder %s22, 0
      %p174 = por %p172, %p173
      %s176 = sadd.s32 %s175, 1
      %p179 = scmp.eq.s32.totalorder %s16, 1
      %p180 = scmp.ne.s32.totalorder %s175, %s177
      %p181 = scmp.eq.s32.totalorder %s16, 0
      %p182 = por %p180, %p181
      %p183 = scmp.ne.s32.totalorder %s175, %s177
      %p184 = scmp.eq.s32.totalorder %s21, 1
      %p185 = por %p183, %p184
      %p186 = scmp.ne.s32.totalorder %s177, %s178
      %p187 = scmp.eq.s32.totalorder %s21, 0
      %p188 = por %p186, %p187
      %p189 = scmp.ne.s32.totalorder %s177, %s178
      %p190 = scmp.eq.s32.totalorder %s22, 1
      %p191 = por %p189, %p190
      %p193 = scmp.ne.s32.totalorder %s178, %s192
      %p194 = scmp.eq.s32.totalorder %s22, 0
      %p195 = por %p193, %p194
      %s196 = ssub.s32 %s16, %s23
      %p197 = scmp.eq.s32.totalorder %s196, 0
      %s199 = sadd.s32 %s198, 1
      %s200 = scalar_select %p197, %s198, %s199
      %p203 = pneg %p197
      %p204 = scmp.eq.s32.totalorder %s16, 1
      %p205 = por %p203, %p204
      %p206 = scmp.ne.s32.totalorder %s198, %s201
      %p207 = scmp.eq.s32.totalorder %s16, 0
      %p208 = por %p206, %p207
      %p209 = scmp.ne.s32.totalorder %s198, %s201
      %p210 = scmp.eq.s32.totalorder %s21, 1
      %p211 = por %p209, %p210
      %p212 = scmp.ne.s32.totalorder %s201, %s202
      %p213 = scmp.eq.s32.totalorder %s21, 0
      %p214 = por %p212, %p213
      %p215 = scmp.ne.s32.totalorder %s201, %s202
      %p216 = scmp.eq.s32.totalorder %s22, 1
      %p217 = por %p215, %p216
      %p219 = scmp.ne.s32.totalorder %s202, %s218
      %p220 = scmp.eq.s32.totalorder %s22, 0
      %p221 = por %p219, %p220
      %p222 = scmp.le.s32.totalorder 1, %s16
      %p223 = scmp.lt.s32.totalorder %s16, 3
      %p224 = pnand %p222, %p223
      %p225 = pneg %p224
      // Predicated region
      $region9: #{tpu_custom_call.1} parent=5 // pred_check
        _
      $region10: #{tpu_custom_call.1} parent=5 // pred_check_branch
        %227 = sbr.rel (%p224) target = $region12
      $region11: #{tpu_custom_call.1} parent=5 // pred_region
        %s228 = ssub.s32 %s16, 1
        // Predicated region
        $region13: #{tpu_custom_call.1} parent=11 // pred_check
          %p229 = pneg %p167
        $region14: #{tpu_custom_call.1} parent=11 // pred_check_branch
          %231 = sbr.rel (%p229) target = $region16
        $region15: #{tpu_custom_call.1} parent=11 // pred_region
          _
        $region16: #{tpu_custom_call.1} parent=11 // pred_fallthru
          _
        // Predicated region
        $region17: #{tpu_custom_call.1} parent=11 // pred_check
          %p232 = pneg %p188
        $region18: #{tpu_custom_call.1} parent=11 // pred_check_branch
          %234 = sbr.rel (%p232) target = $region20
        $region19: #{tpu_custom_call.1} parent=11 // pred_region
          _
        $region20: #{tpu_custom_call.1} parent=11 // pred_fallthru
          _
      $region12: #{tpu_custom_call.1} parent=5 // pred_fallthru
        _
      %p235 = scmp.lt.s32.totalorder %s16, 2
      // Predicated region
      $region21: #{tpu_custom_call.1} parent=5 // pred_check
        %p236 = pneg %p235
      $region22: #{tpu_custom_call.1} parent=5 // pred_check_branch
        %238 = sbr.rel (%p236) target = $region24
      $region23: #{tpu_custom_call.1} parent=5 // pred_region
        // Predicated region
        $region25: #{tpu_custom_call.1} parent=23 // pred_check
          %p239 = pneg %p36
        $region26: #{tpu_custom_call.1} parent=23 // pred_check_branch
          %241 = sbr.rel (%p239) target = $region28
        $region27: #{tpu_custom_call.1} parent=23 // pred_region
          %s242 = smul.u32 4, %s16
          %s243 = ssub.s32 5, %s242
          %p244 = scmp.lt.s32.totalorder %s243, 4
          %s245 = scalar_select %p244, %s243, 4
          %s246 = smul.u32 8, %s245
          %p247 = scmp.lt.s32.totalorder %s242, 4
          %s248 = scalar_select %p247, %s242, 4
          %s249 = smul.addr %s248, 8
          %s250 = scalar_lea.vmem %s0, %s249
          %s251 = smul.u32 4, %s16
          %s252 = ssub.s32 5, %s251
          %p253 = scmp.lt.s32.totalorder %s252, 4
          %s254 = scalar_select %p253, %s252, 4
          %s255 = smul.u32 8, %s254
        $region28: #{tpu_custom_call.1} parent=23 // pred_fallthru
          _
        // Predicated region
        $region29: #{tpu_custom_call.1} parent=23 // pred_check
          %p256 = pneg %p62
        $region30: #{tpu_custom_call.1} parent=23 // pred_check_branch
          %258 = sbr.rel (%p256) target = $region32
        $region31: #{tpu_custom_call.1} parent=23 // pred_region
          %s259 = smul.u32 4, %s16
          %s260 = ssub.s32 5, %s259
          %p261 = scmp.lt.s32.totalorder %s260, 4
          %s262 = scalar_select %p261, %s260, 4
          %s263 = smul.u32 8, %s262
          %p264 = scmp.lt.s32.totalorder %s259, 4
          %s265 = scalar_select %p264, %s259, 4
          %s266 = smul.addr %s265, 8
          %s267 = scalar_lea.vmem %s1, %s266
          %s268 = smul.u32 4, %s16
          %s269 = ssub.s32 5, %s268
          %p270 = scmp.lt.s32.totalorder %s269, 4
          %s271 = scalar_select %p270, %s269, 4
          %s272 = smul.u32 8, %s271
        $region32: #{tpu_custom_call.1} parent=23 // pred_fallthru
          _
        // Predicated region
        $region33: #{tpu_custom_call.1} parent=23 // pred_check
          %p273 = pneg %p88
        $region34: #{tpu_custom_call.1} parent=23 // pred_check_branch
          %275 = sbr.rel (%p273) target = $region36
        $region35: #{tpu_custom_call.1} parent=23 // pred_region
          %s276 = smul.u32 4, %s16
          %s277 = ssub.s32 5, %s276
          %p278 = scmp.lt.s32.totalorder %s277, 4
          %s279 = scalar_select %p278, %s277, 4
          %s280 = smul.u32 8, %s279
          %p281 = scmp.lt.s32.totalorder %s276, 4
          %s282 = scalar_select %p281, %s276, 4
          %s283 = smul.addr %s282, 8
          %s284 = scalar_lea.vmem %s2, %s283
          %s285 = smul.u32 4, %s16
          %s286 = ssub.s32 5, %s285
          %p287 = scmp.lt.s32.totalorder %s286, 4
          %s288 = scalar_select %p287, %s286, 4
          %s289 = smul.u32 8, %s288
        $region36: #{tpu_custom_call.1} parent=23 // pred_fallthru
          _
        // Predicated region
        $region37: #{tpu_custom_call.1} parent=23 // pred_check
          %p290 = pneg %p114
        $region38: #{tpu_custom_call.1} parent=23 // pred_check_branch
          %292 = sbr.rel (%p290) target = $region40
        $region39: #{tpu_custom_call.1} parent=23 // pred_region
          %s293 = smul.u32 4, %s16
          %s294 = ssub.s32 5, %s293
          %p295 = scmp.lt.s32.totalorder %s294, 4
          %s296 = scalar_select %p295, %s294, 4
          %s297 = smul.u32 8, %s296
          %p298 = scmp.lt.s32.totalorder %s293, 4
          %s299 = scalar_select %p298, %s293, 4
          %s300 = smul.addr %s299, 8
          %s301 = scalar_lea.vmem %s3, %s300
          %s302 = smul.u32 4, %s16
          %s303 = ssub.s32 5, %s302
          %p304 = scmp.lt.s32.totalorder %s303, 4
          %s305 = scalar_select %p304, %s303, 4
          %s306 = smul.u32 8, %s305
        $region40: #{tpu_custom_call.1} parent=23 // pred_fallthru
          _
        // Predicated region
        $region41: #{tpu_custom_call.1} parent=23 // pred_check
          %p307 = pneg %p140
        $region42: #{tpu_custom_call.1} parent=23 // pred_check_branch
          %309 = sbr.rel (%p307) target = $region44
        $region43: #{tpu_custom_call.1} parent=23 // pred_region
          %s310 = smul.u32 4, %s16
          %s311 = ssub.s32 5, %s310
          %p312 = scmp.lt.s32.totalorder %s311, 4
          %s313 = scalar_select %p312, %s311, 4
          %s314 = smul.u32 8, %s313
          %p315 = scmp.lt.s32.totalorder %s310, 4
          %s316 = scalar_select %p315, %s310, 4
          %s317 = smul.addr %s316, 8
          %s318 = scalar_lea.vmem %s4, %s317
          %s319 = smul.u32 4, %s16
          %s320 = ssub.s32 5, %s319
          %p321 = scmp.lt.s32.totalorder %s320, 4
          %s322 = scalar_select %p321, %s320, 4
          %s323 = smul.u32 8, %s322
        $region44: #{tpu_custom_call.1} parent=23 // pred_fallthru
          _
      $region24: #{tpu_custom_call.1} parent=5 // pred_fallthru
        _
      %p324 = scmp.le.s32.totalorder 1, %s16
      %p325 = scmp.lt.s32.totalorder %s16, 3
      %p326 = pnand %p324, %p325
      %p327 = pneg %p326
      // Predicated region
      $region45: #{tpu_custom_call.1} parent=5 // pred_check
        _
      $region46: #{tpu_custom_call.1} parent=5 // pred_check_branch
        %329 = sbr.rel (%p326) target = $region48
      $region47: #{tpu_custom_call.1} parent=5 // pred_region
        %s330 = ssub.s32 %s16, 1
        %s331 = smul.u32 4, %s21
        %s332 = ssub.s32 5, %s331
        %p333 = scmp.lt.s32.totalorder %s332, 4
        %s334 = scalar_select %p333, %s332, 4
        %s335 = smul.u32 8, %s334
        %p336 = scmp.lt.s32.totalorder %s331, 4
        %s337 = scalar_select %p336, %s331, 4
        %s338 = smul.addr %s337, 8
        %s339 = scalar_lea.vmem %s0, %s338
        %p340 = pneg %p42
        %p341 = pneg %p39
        %s342 = smul.u32 4, %s21
        %s343 = ssub.s32 5, %s342
        %p344 = scmp.lt.s32.totalorder %s343, 4
        %s345 = scalar_select %p344, %s343, 4
        %s346 = smul.u32 8, %s345
        %p347 = scmp.lt.s32.totalorder %s342, 4
        %s348 = scalar_select %p347, %s342, 4
        %s349 = smul.addr %s348, 8
        %s350 = scalar_lea.vmem %s1, %s349
        %p351 = pneg %p68
        %p352 = pneg %p65
        %s353 = smul.u32 4, %s21
        %s354 = ssub.s32 5, %s353
        %p355 = scmp.lt.s32.totalorder %s354, 4
        %s356 = scalar_select %p355, %s354, 4
        %s357 = smul.u32 8, %s356
        %p358 = scmp.lt.s32.totalorder %s353, 4
        %s359 = scalar_select %p358, %s353, 4
        %s360 = smul.addr %s359, 8
        %s361 = scalar_lea.vmem %s2, %s360
        %p362 = pneg %p94
        %p363 = pneg %p91
        %s364 = smul.u32 4, %s21
        %s365 = ssub.s32 5, %s364
        %p366 = scmp.lt.s32.totalorder %s365, 4
        %s367 = scalar_select %p366, %s365, 4
        %s368 = smul.u32 8, %s367
        %p369 = scmp.lt.s32.totalorder %s364, 4
        %s370 = scalar_select %p369, %s364, 4
        %s371 = smul.addr %s370, 8
        %s372 = scalar_lea.vmem %s3, %s371
        %p373 = pneg %p120
        %p374 = pneg %p117
        %s375 = smul.u32 4, %s21
        %s376 = ssub.s32 5, %s375
        %p377 = scmp.lt.s32.totalorder %s376, 4
        %s378 = scalar_select %p377, %s376, 4
        %s379 = smul.u32 8, %s378
        %p380 = scmp.lt.s32.totalorder %s375, 4
        %s381 = scalar_select %p380, %s375, 4
        %s382 = smul.addr %s381, 8
        %s383 = scalar_lea.vmem %s4, %s382
        %p384 = pneg %p146
        %p385 = pneg %p143
        %p386 = pneg %p167
        %p387 = pneg %p164
        %p388 = pneg %p188
        %p389 = pneg %p185
        %p390 = pneg %p214
        %p391 = pneg %p211
        %s392 = sand.u32 %s201, 1
        %s393 = scalar_lea.sflag [#allocation3], %s392
        %s394 = sand.u32 %s201, 1
        %s395 = smul.addr %s394, 32
        %s396 = scalar_lea.vmem [#allocation2], %s395
        %s397 = smul.u32 4, %s21
        %s398 = ssub.s32 5, %s397
        %p399 = scmp.lt.s32.totalorder %s398, 4
        %s400 = scalar_select %p399, %s398, 4
        %s401 = smul.u32 8, %s400
        %p402 = scmp.lt.s32.totalorder %s397, 4
        %s403 = scalar_select %p402, %s397, 4
        %s404 = smul.addr %s403, 8
        %s405 = scalar_lea.vmem %s0, %s404
        %s406 = smul.u32 4, %s21
        %s407 = ssub.s32 5, %s406
        %p408 = scmp.lt.s32.totalorder %s407, 4
        %s409 = scalar_select %p408, %s407, 4
        %s410 = smul.u32 8, %s409
        %s411 = smul.u32 4, %s21
        %s412 = ssub.s32 5, %s411
        %p413 = scmp.lt.s32.totalorder %s412, 4
        %s414 = scalar_select %p413, %s412, 4
        %s415 = smul.u32 8, %s414
        %p416 = scmp.lt.s32.totalorder %s411, 4
        %s417 = scalar_select %p416, %s411, 4
        %s418 = smul.addr %s417, 8
        %s419 = scalar_lea.vmem %s1, %s418
        %s420 = smul.u32 4, %s21
        %s421 = ssub.s32 5, %s420
        %p422 = scmp.lt.s32.totalorder %s421, 4
        %s423 = scalar_select %p422, %s421, 4
        %s424 = smul.u32 8, %s423
        %s425 = smul.u32 4, %s21
        %s426 = ssub.s32 5, %s425
        %p427 = scmp.lt.s32.totalorder %s426, 4
        %s428 = scalar_select %p427, %s426, 4
        %s429 = smul.u32 8, %s428
        %p430 = scmp.lt.s32.totalorder %s425, 4
        %s431 = scalar_select %p430, %s425, 4
        %s432 = smul.addr %s431, 8
        %s433 = scalar_lea.vmem %s2, %s432
        %s434 = smul.u32 4, %s21
        %s435 = ssub.s32 5, %s434
        %p436 = scmp.lt.s32.totalorder %s435, 4
        %s437 = scalar_select %p436, %s435, 4
        %s438 = smul.u32 8, %s437
        %s439 = smul.u32 4, %s21
        %s440 = ssub.s32 5, %s439
        %p441 = scmp.lt.s32.totalorder %s440, 4
        %s442 = scalar_select %p441, %s440, 4
        %s443 = smul.u32 8, %s442
        %p444 = scmp.lt.s32.totalorder %s439, 4
        %s445 = scalar_select %p444, %s439, 4
        %s446 = smul.addr %s445, 8
        %s447 = scalar_lea.vmem %s3, %s446
        %s448 = smul.u32 4, %s21
        %s449 = ssub.s32 5, %s448
        %p450 = scmp.lt.s32.totalorder %s449, 4
        %s451 = scalar_select %p450, %s449, 4
        %s452 = smul.u32 8, %s451
        %s453 = smul.u32 4, %s21
        %s454 = ssub.s32 5, %s453
        %p455 = scmp.lt.s32.totalorder %s454, 4
        %s456 = scalar_select %p455, %s454, 4
        %s457 = smul.u32 8, %s456
        %p458 = scmp.lt.s32.totalorder %s453, 4
        %s459 = scalar_select %p458, %s453, 4
        %s460 = smul.addr %s459, 8
        %s461 = scalar_lea.vmem %s4, %s460
        %s462 = smul.u32 4, %s21
        %s463 = ssub.s32 5, %s462
        %p464 = scmp.lt.s32.totalorder %s463, 4
        %s465 = scalar_select %p464, %s463, 4
        %s466 = smul.u32 8, %s465
        %s467 = smul.u32 4, %s21
        %s468 = ssub.s32 5, %s467
        %p469 = scmp.lt.s32.totalorder %s468, 4
        %s470 = scalar_select %p469, %s468, 4
        %s471 = smul.u32 8, %s470
        %v473 = vld [vmem:[%s419] sm:$0xff]
        %v474 = vld [vmem:[%s419 + $0x8] sm:$0xff]
        %v475 = vld [vmem:[%s419 + $0x10] sm:$0xff]
        %v476 = vld [vmem:[%s419 + $0x18] sm:$0xff]
        %v477 = vpack.c.bf16 %v474, %v473
        %v478 = vpack.c.bf16 %v476, %v475
        %v479 = vld [vmem:[%s5] sm:$0xf]
        %v480 = vld [vmem:[%s5 + $0x4] sm:$0xf]
        %v481 = vld [vmem:[%s5 + $0x8] sm:$0xf]
        %v482 = vld [vmem:[%s5 + $0xc] sm:$0xf]
        %v483 = vld [vmem:[%s5 + $0x10] sm:$0xf]
        %v484 = vld [vmem:[%s5 + $0x14] sm:$0xf]
        %v485 = vld [vmem:[%s5 + $0x18] sm:$0xf]
        %v486 = vld [vmem:[%s5 + $0x1c] sm:$0xf]
        %v487 = vld [vmem:[%s5 + $0x20] sm:$0xf]
        %v488 = vld [vmem:[%s5 + $0x24] sm:$0xf]
        %v489 = vld [vmem:[%s5 + $0x28] sm:$0xf]
        %v490 = vld [vmem:[%s5 + $0x2c] sm:$0xf]
        %v491 = vld [vmem:[%s5 + $0x30] sm:$0xf]
        %v492 = vld [vmem:[%s5 + $0x34] sm:$0xf]
        %v493 = vld [vmem:[%s5 + $0x38] sm:$0xf]
        %v494 = vld [vmem:[%s5 + $0x3c] sm:$0xf]
        %v511 = vunpack.c.l.b16 %v479
        %v512 = vunpack.c.l.b16 %v480
        %v513 = vunpack.c.l.b16 %v481
        %v514 = vunpack.c.l.b16 %v482
        %v515 = vunpack.c.l.b16 %v483
        %v516 = vunpack.c.l.b16 %v484
        %v517 = vunpack.c.l.b16 %v485
        %v518 = vunpack.c.l.b16 %v486
        %v519 = vunpack.c.l.b16 %v487
        %v520 = vunpack.c.l.b16 %v488
        %v521 = vunpack.c.l.b16 %v489
        %v522 = vunpack.c.l.b16 %v490
        %v523 = vunpack.c.l.b16 %v491
        %v524 = vunpack.c.l.b16 %v492
        %v525 = vunpack.c.l.b16 %v493
        %v526 = vunpack.c.l.b16 %v494
        %v527 = vpack.c.b16 %v512, %v511
        %v528 = vpack.c.b16 %v514, %v513
        %v529 = vpack.c.b16 %v516, %v515
        %v530 = vpack.c.b16 %v518, %v517
        %v531 = vpack.c.b16 %v520, %v519
        %v532 = vpack.c.b16 %v522, %v521
        %v533 = vpack.c.b16 %v524, %v523
        %v534 = vpack.c.b16 %v526, %v525
        %543 = vmatpush.bf16.msra.mxu0 %v534
        %544 = vmatpush.bf16.msra.mxu0 %v533
        %545 = vmatpush.bf16.msra.mxu0 %v532
        %546 = vmatpush.bf16.msra.mxu0 %v531
        %547 = vmatpush.bf16.msra.mxu0 %v530
        %548 = vmatpush.bf16.msra.mxu0 %v529
        %549 = vmatpush.bf16.msra.mxu0 %v528
        %550 = vmatpush.bf16.msra.mxu0 %v527
        %551 = vmatmul.bf16.gmra.mxu0 %v477
        %v552 = vpop.f32.mrf.mxu0
        %v553 = vadd.f32 0.0, %v552
        %v554 = vpop.f32.mrf.mxu0
        %v555 = vadd.f32 0.0, %v554
        %556 = vmatmul.bf16.gmra.mxu0 %v478
        %v557 = vpop.f32.mrf.mxu0
        %v558 = vadd.f32 0.0, %v557
        %v559 = vpop.f32.mrf.mxu0
        %v560 = vadd.f32 0.0, %v559
        %561 = vdwg.mxu0
        %v562 = vmax.f32 %v553, 0.0
        %v563 = vmax.f32 %v555, 0.0
        %v564 = vmax.f32 %v558, 0.0
        %v565 = vmax.f32 %v560, 0.0
        %v566 = vpack.c.bf16 %v563, %v562
        %v567 = vpack.c.bf16 %v565, %v564
        %v568 = vld [vmem:[%s6] sm:$0xf]
        %v569 = vld [vmem:[%s6 + $0x4] sm:$0xf]
        %v570 = vld [vmem:[%s6 + $0x8] sm:$0xf]
        %v571 = vld [vmem:[%s6 + $0xc] sm:$0xf]
        %v572 = vld [vmem:[%s6 + $0x10] sm:$0xf]
        %v573 = vld [vmem:[%s6 + $0x14] sm:$0xf]
        %v574 = vld [vmem:[%s6 + $0x18] sm:$0xf]
        %v575 = vld [vmem:[%s6 + $0x1c] sm:$0xf]
        %v576 = vld [vmem:[%s433] sm:$0xff]
        %v577 = vld [vmem:[%s433 + $0x8] sm:$0xff]
        %v578 = vld [vmem:[%s433 + $0x10] sm:$0xff]
        %v579 = vld [vmem:[%s433 + $0x18] sm:$0xff]
        %v580 = vpack.c.bf16 %v577, %v576
        %v581 = vpack.c.bf16 %v579, %v578
        %s582 = scalar_lea.vmem %s5, 64
        %v583 = vld [vmem:[%s582] sm:$0xf]
        %v584 = vld [vmem:[%s582 + $0x4] sm:$0xf]
        %v585 = vld [vmem:[%s582 + $0x8] sm:$0xf]
        %v586 = vld [vmem:[%s582 + $0xc] sm:$0xf]
        %v587 = vld [vmem:[%s582 + $0x10] sm:$0xf]
        %v588 = vld [vmem:[%s582 + $0x14] sm:$0xf]
        %v589 = vld [vmem:[%s582 + $0x18] sm:$0xf]
        %v590 = vld [vmem:[%s582 + $0x1c] sm:$0xf]
        %v591 = vld [vmem:[%s582 + $0x20] sm:$0xf]
        %v592 = vld [vmem:[%s582 + $0x24] sm:$0xf]
        %v593 = vld [vmem:[%s582 + $0x28] sm:$0xf]
        %v594 = vld [vmem:[%s582 + $0x2c] sm:$0xf]
        %v595 = vld [vmem:[%s582 + $0x30] sm:$0xf]
        %v596 = vld [vmem:[%s582 + $0x34] sm:$0xf]
        %v597 = vld [vmem:[%s582 + $0x38] sm:$0xf]
        %v598 = vld [vmem:[%s582 + $0x3c] sm:$0xf]
        %v615 = vunpack.c.l.b16 %v583
        %v616 = vunpack.c.l.b16 %v584
        %v617 = vunpack.c.l.b16 %v585
        %v618 = vunpack.c.l.b16 %v586
        %v619 = vunpack.c.l.b16 %v587
        %v620 = vunpack.c.l.b16 %v588
        %v621 = vunpack.c.l.b16 %v589
        %v622 = vunpack.c.l.b16 %v590
        %v623 = vunpack.c.l.b16 %v591
        %v624 = vunpack.c.l.b16 %v592
        %v625 = vunpack.c.l.b16 %v593
        %v626 = vunpack.c.l.b16 %v594
        %v627 = vunpack.c.l.b16 %v595
        %v628 = vunpack.c.l.b16 %v596
        %v629 = vunpack.c.l.b16 %v597
        %v630 = vunpack.c.l.b16 %v598
        %v631 = vpack.c.b16 %v616, %v615
        %v632 = vpack.c.b16 %v618, %v617
        %v633 = vpack.c.b16 %v620, %v619
        %v634 = vpack.c.b16 %v622, %v621
        %v635 = vpack.c.b16 %v624, %v623
        %v636 = vpack.c.b16 %v626, %v625
        %v637 = vpack.c.b16 %v628, %v627
        %v638 = vpack.c.b16 %v630, %v629
        %647 = vmatpush.bf16.msra.mxu0 %v638
        %648 = vmatpush.bf16.msra.mxu0 %v637
        %649 = vmatpush.bf16.msra.mxu0 %v636
        %650 = vmatpush.bf16.msra.mxu0 %v635
        %651 = vmatpush.bf16.msra.mxu0 %v634
        %652 = vmatpush.bf16.msra.mxu0 %v633
        %653 = vmatpush.bf16.msra.mxu0 %v632
        %654 = vmatpush.bf16.msra.mxu0 %v631
        %655 = vmatmul.bf16.gmra.mxu0 %v580
        %v656 = vpop.f32.mrf.mxu0
        %v657 = vadd.f32 0.0, %v656
        %v658 = vpop.f32.mrf.mxu0
        %v659 = vadd.f32 0.0, %v658
        %660 = vmatmul.bf16.gmra.mxu0 %v581
        %v661 = vpop.f32.mrf.mxu0
        %v662 = vadd.f32 0.0, %v661
        %v663 = vpop.f32.mrf.mxu0
        %v664 = vadd.f32 0.0, %v663
        %665 = vdwg.mxu0
        %v666 = vmax.f32 %v657, 0.0
        %v667 = vmax.f32 %v659, 0.0
        %v668 = vmax.f32 %v662, 0.0
        %v669 = vmax.f32 %v664, 0.0
        %v670 = vpack.c.bf16 %v667, %v666
        %v671 = vpack.c.bf16 %v669, %v668
        %s672 = scalar_lea.vmem %s6, 32
        %v673 = vld [vmem:[%s672] sm:$0xf]
        %v674 = vld [vmem:[%s672 + $0x4] sm:$0xf]
        %v675 = vld [vmem:[%s672 + $0x8] sm:$0xf]
        %v676 = vld [vmem:[%s672 + $0xc] sm:$0xf]
        %v677 = vld [vmem:[%s672 + $0x10] sm:$0xf]
        %v678 = vld [vmem:[%s672 + $0x14] sm:$0xf]
        %v679 = vld [vmem:[%s672 + $0x18] sm:$0xf]
        %v680 = vld [vmem:[%s672 + $0x1c] sm:$0xf]
        %v689 = vunpack.c.l.b16 %v673
        %v690 = vunpack.c.l.b16 %v674
        %v691 = vunpack.c.l.b16 %v675
        %v692 = vunpack.c.l.b16 %v676
        %v693 = vunpack.c.l.b16 %v677
        %v694 = vunpack.c.l.b16 %v678
        %v695 = vunpack.c.l.b16 %v679
        %v696 = vunpack.c.l.b16 %v680
        %v697 = vpack.c.b16 %v690, %v689
        %v698 = vpack.c.b16 %v692, %v691
        %v699 = vpack.c.b16 %v694, %v693
        %v700 = vpack.c.b16 %v696, %v695
        %vm705 = vcmask 523264
        %v707 = vsel %vm705, %v670, 0
        %v710 = vsel %vm705, %v671, 0
        %712 = vmatpush.bf16.msra.mxu0 0
        %713 = vmatpush.bf16.msra.mxu0 0
        %714 = vmatpush.bf16.msra.mxu0 0
        %715 = vmatpush.bf16.msra.mxu0 0
        %716 = vmatpush.bf16.msra.mxu0 %v700
        %717 = vmatpush.bf16.msra.mxu0 %v699
        %718 = vmatpush.bf16.msra.mxu0 %v698
        %719 = vmatpush.bf16.msra.mxu0 %v697
        %720 = vmatmul.bf16.gmra.mxu0 %v707
        %v721 = vpop.f32.mrf.mxu0
        %v722 = vadd.f32 0.0, %v721
        %v723 = vpop.f32.mrf.mxu0
        %v724 = vadd.f32 0.0, %v723
        %725 = vmatmul.bf16.gmra.mxu0 %v710
        %v726 = vpop.f32.mrf.mxu0
        %v727 = vadd.f32 0.0, %v726
        %v728 = vpop.f32.mrf.mxu0
        %v729 = vadd.f32 0.0, %v728
        %730 = vdwg.mxu0
        %v739 = vunpack.c.l.b16 %v568
        %v740 = vunpack.c.l.b16 %v569
        %v741 = vunpack.c.l.b16 %v570
        %v742 = vunpack.c.l.b16 %v571
        %v743 = vunpack.c.l.b16 %v572
        %v744 = vunpack.c.l.b16 %v573
        %v745 = vunpack.c.l.b16 %v574
        %v746 = vunpack.c.l.b16 %v575
        %v747 = vpack.c.b16 %v740, %v739
        %v748 = vpack.c.b16 %v742, %v741
        %v749 = vpack.c.b16 %v744, %v743
        %v750 = vpack.c.b16 %v746, %v745
        %v756 = vsel %vm705, %v566, 0
        %v759 = vsel %vm705, %v567, 0
        %761 = vmatpush.bf16.msra.mxu0 0
        %762 = vmatpush.bf16.msra.mxu0 0
        %763 = vmatpush.bf16.msra.mxu0 0
        %764 = vmatpush.bf16.msra.mxu0 0
        %765 = vmatpush.bf16.msra.mxu0 %v750
        %766 = vmatpush.bf16.msra.mxu0 %v749
        %767 = vmatpush.bf16.msra.mxu0 %v748
        %768 = vmatpush.bf16.msra.mxu0 %v747
        %769 = vmatmul.bf16.gmra.mxu0 %v756
        %v770 = vpop.f32.mrf.mxu0
        %v771 = vadd.f32 %v722, %v770
        %v772 = vpop.f32.mrf.mxu0
        %v773 = vadd.f32 %v724, %v772
        %774 = vmatmul.bf16.gmra.mxu0 %v759
        %v775 = vpop.f32.mrf.mxu0
        %v776 = vadd.f32 %v727, %v775
        %v777 = vpop.f32.mrf.mxu0
        %v778 = vadd.f32 %v729, %v777
        %779 = vdwg.mxu0
        %v780 = vld [vmem:[%s447] sm:$0xff]
        %v781 = vld [vmem:[%s447 + $0x8] sm:$0xff]
        %v782 = vld [vmem:[%s447 + $0x10] sm:$0xff]
        %v783 = vld [vmem:[%s447 + $0x18] sm:$0xff]
        %v784 = vpack.c.bf16 %v781, %v780
        %v785 = vpack.c.bf16 %v783, %v782
        %s786 = scalar_lea.vmem %s5, 128
        %v787 = vld [vmem:[%s786] sm:$0xf]
        %v788 = vld [vmem:[%s786 + $0x4] sm:$0xf]
        %v789 = vld [vmem:[%s786 + $0x8] sm:$0xf]
        %v790 = vld [vmem:[%s786 + $0xc] sm:$0xf]
        %v791 = vld [vmem:[%s786 + $0x10] sm:$0xf]
        %v792 = vld [vmem:[%s786 + $0x14] sm:$0xf]
        %v793 = vld [vmem:[%s786 + $0x18] sm:$0xf]
        %v794 = vld [vmem:[%s786 + $0x1c] sm:$0xf]
        %v795 = vld [vmem:[%s786 + $0x20] sm:$0xf]
        %v796 = vld [vmem:[%s786 + $0x24] sm:$0xf]
        %v797 = vld [vmem:[%s786 + $0x28] sm:$0xf]
        %v798 = vld [vmem:[%s786 + $0x2c] sm:$0xf]
        %v799 = vld [vmem:[%s786 + $0x30] sm:$0xf]
        %v800 = vld [vmem:[%s786 + $0x34] sm:$0xf]
        %v801 = vld [vmem:[%s786 + $0x38] sm:$0xf]
        %v802 = vld [vmem:[%s786 + $0x3c] sm:$0xf]
        %v819 = vunpack.c.l.b16 %v787
        %v820 = vunpack.c.l.b16 %v788
        %v821 = vunpack.c.l.b16 %v789
        %v822 = vunpack.c.l.b16 %v790
        %v823 = vunpack.c.l.b16 %v791
        %v824 = vunpack.c.l.b16 %v792
        %v825 = vunpack.c.l.b16 %v793
        %v826 = vunpack.c.l.b16 %v794
        %v827 = vunpack.c.l.b16 %v795
        %v828 = vunpack.c.l.b16 %v796
        %v829 = vunpack.c.l.b16 %v797
        %v830 = vunpack.c.l.b16 %v798
        %v831 = vunpack.c.l.b16 %v799
        %v832 = vunpack.c.l.b16 %v800
        %v833 = vunpack.c.l.b16 %v801
        %v834 = vunpack.c.l.b16 %v802
        %v835 = vpack.c.b16 %v820, %v819
        %v836 = vpack.c.b16 %v822, %v821
        %v837 = vpack.c.b16 %v824, %v823
        %v838 = vpack.c.b16 %v826, %v825
        %v839 = vpack.c.b16 %v828, %v827
        %v840 = vpack.c.b16 %v830, %v829
        %v841 = vpack.c.b16 %v832, %v831
        %v842 = vpack.c.b16 %v834, %v833
        %851 = vmatpush.bf16.msra.mxu0 %v842
        %852 = vmatpush.bf16.msra.mxu0 %v841
        %853 = vmatpush.bf16.msra.mxu0 %v840
        %854 = vmatpush.bf16.msra.mxu0 %v839
        %855 = vmatpush.bf16.msra.mxu0 %v838
        %856 = vmatpush.bf16.msra.mxu0 %v837
        %857 = vmatpush.bf16.msra.mxu0 %v836
        %858 = vmatpush.bf16.msra.mxu0 %v835
        %859 = vmatmul.bf16.gmra.mxu0 %v784
        %v860 = vpop.f32.mrf.mxu0
        %v861 = vadd.f32 0.0, %v860
        %v862 = vpop.f32.mrf.mxu0
        %v863 = vadd.f32 0.0, %v862
        %864 = vmatmul.bf16.gmra.mxu0 %v785
        %v865 = vpop.f32.mrf.mxu0
        %v866 = vadd.f32 0.0, %v865
        %v867 = vpop.f32.mrf.mxu0
        %v868 = vadd.f32 0.0, %v867
        %869 = vdwg.mxu0
        %v870 = vmax.f32 %v861, 0.0
        %v871 = vmax.f32 %v863, 0.0
        %v872 = vmax.f32 %v866, 0.0
        %v873 = vmax.f32 %v868, 0.0
        %v874 = vpack.c.bf16 %v871, %v870
        %v875 = vpack.c.bf16 %v873, %v872
        %s876 = scalar_lea.vmem %s6, 64
        %v877 = vld [vmem:[%s876] sm:$0xf]
        %v878 = vld [vmem:[%s876 + $0x4] sm:$0xf]
        %v879 = vld [vmem:[%s876 + $0x8] sm:$0xf]
        %v880 = vld [vmem:[%s876 + $0xc] sm:$0xf]
        %v881 = vld [vmem:[%s876 + $0x10] sm:$0xf]
        %v882 = vld [vmem:[%s876 + $0x14] sm:$0xf]
        %v883 = vld [vmem:[%s876 + $0x18] sm:$0xf]
        %v884 = vld [vmem:[%s876 + $0x1c] sm:$0xf]
        %v893 = vunpack.c.l.b16 %v877
        %v894 = vunpack.c.l.b16 %v878
        %v895 = vunpack.c.l.b16 %v879
        %v896 = vunpack.c.l.b16 %v880
        %v897 = vunpack.c.l.b16 %v881
        %v898 = vunpack.c.l.b16 %v882
        %v899 = vunpack.c.l.b16 %v883
        %v900 = vunpack.c.l.b16 %v884
        %v901 = vpack.c.b16 %v894, %v893
        %v902 = vpack.c.b16 %v896, %v895
        %v903 = vpack.c.b16 %v898, %v897
        %v904 = vpack.c.b16 %v900, %v899
        %v910 = vsel %vm705, %v874, 0
        %v913 = vsel %vm705, %v875, 0
        %915 = vmatpush.bf16.msra.mxu0 0
        %916 = vmatpush.bf16.msra.mxu0 0
        %917 = vmatpush.bf16.msra.mxu0 0
        %918 = vmatpush.bf16.msra.mxu0 0
        %919 = vmatpush.bf16.msra.mxu0 %v904
        %920 = vmatpush.bf16.msra.mxu0 %v903
        %921 = vmatpush.bf16.msra.mxu0 %v902
        %922 = vmatpush.bf16.msra.mxu0 %v901
        %923 = vmatmul.bf16.gmra.mxu0 %v910
        %v924 = vpop.f32.mrf.mxu0
        %v925 = vadd.f32 0.0, %v924
        %v926 = vpop.f32.mrf.mxu0
        %v927 = vadd.f32 0.0, %v926
        %928 = vmatmul.bf16.gmra.mxu0 %v913
        %v929 = vpop.f32.mrf.mxu0
        %v930 = vadd.f32 0.0, %v929
        %v931 = vpop.f32.mrf.mxu0
        %v932 = vadd.f32 0.0, %v931
        %933 = vdwg.mxu0
        %v934 = vadd.f32 %v771, %v925
        %v935 = vadd.f32 %v773, %v927
        %v936 = vadd.f32 %v776, %v930
        %v937 = vadd.f32 %v778, %v932
        %v938 = vld [vmem:[%s461] sm:$0xff]
        %v939 = vld [vmem:[%s461 + $0x8] sm:$0xff]
        %v940 = vld [vmem:[%s461 + $0x10] sm:$0xff]
        %v941 = vld [vmem:[%s461 + $0x18] sm:$0xff]
        %v942 = vpack.c.bf16 %v939, %v938
        %v943 = vpack.c.bf16 %v941, %v940
        %s944 = scalar_lea.vmem %s5, 192
        %v945 = vld [vmem:[%s944] sm:$0xf]
        %v946 = vld [vmem:[%s944 + $0x4] sm:$0xf]
        %v947 = vld [vmem:[%s944 + $0x8] sm:$0xf]
        %v948 = vld [vmem:[%s944 + $0xc] sm:$0xf]
        %v949 = vld [vmem:[%s944 + $0x10] sm:$0xf]
        %v950 = vld [vmem:[%s944 + $0x14] sm:$0xf]
        %v951 = vld [vmem:[%s944 + $0x18] sm:$0xf]
        %v952 = vld [vmem:[%s944 + $0x1c] sm:$0xf]
        %v953 = vld [vmem:[%s944 + $0x20] sm:$0xf]
        %v954 = vld [vmem:[%s944 + $0x24] sm:$0xf]
        %v955 = vld [vmem:[%s944 + $0x28] sm:$0xf]
        %v956 = vld [vmem:[%s944 + $0x2c] sm:$0xf]
        %v957 = vld [vmem:[%s944 + $0x30] sm:$0xf]
        %v958 = vld [vmem:[%s944 + $0x34] sm:$0xf]
        %v959 = vld [vmem:[%s944 + $0x38] sm:$0xf]
        %v960 = vld [vmem:[%s944 + $0x3c] sm:$0xf]
        %v977 = vunpack.c.l.b16 %v945
        %v978 = vunpack.c.l.b16 %v946
        %v979 = vunpack.c.l.b16 %v947
        %v980 = vunpack.c.l.b16 %v948
        %v981 = vunpack.c.l.b16 %v949
        %v982 = vunpack.c.l.b16 %v950
        %v983 = vunpack.c.l.b16 %v951
        %v984 = vunpack.c.l.b16 %v952
        %v985 = vunpack.c.l.b16 %v953
        %v986 = vunpack.c.l.b16 %v954
        %v987 = vunpack.c.l.b16 %v955
        %v988 = vunpack.c.l.b16 %v956
        %v989 = vunpack.c.l.b16 %v957
        %v990 = vunpack.c.l.b16 %v958
        %v991 = vunpack.c.l.b16 %v959
        %v992 = vunpack.c.l.b16 %v960
        %v993 = vpack.c.b16 %v978, %v977
        %v994 = vpack.c.b16 %v980, %v979
        %v995 = vpack.c.b16 %v982, %v981
        %v996 = vpack.c.b16 %v984, %v983
        %v997 = vpack.c.b16 %v986, %v985
        %v998 = vpack.c.b16 %v988, %v987
        %v999 = vpack.c.b16 %v990, %v989
        %v1000 = vpack.c.b16 %v992, %v991
        %1009 = vmatpush.bf16.msra.mxu0 %v1000
        %1010 = vmatpush.bf16.msra.mxu0 %v999
        %1011 = vmatpush.bf16.msra.mxu0 %v998
        %1012 = vmatpush.bf16.msra.mxu0 %v997
        %1013 = vmatpush.bf16.msra.mxu0 %v996
        %1014 = vmatpush.bf16.msra.mxu0 %v995
        %1015 = vmatpush.bf16.msra.mxu0 %v994
        %1016 = vmatpush.bf16.msra.mxu0 %v993
        %1017 = vmatmul.bf16.gmra.mxu0 %v942
        %v1018 = vpop.f32.mrf.mxu0
        %v1019 = vadd.f32 0.0, %v1018
        %v1020 = vpop.f32.mrf.mxu0
        %v1021 = vadd.f32 0.0, %v1020
        %1022 = vmatmul.bf16.gmra.mxu0 %v943
        %v1023 = vpop.f32.mrf.mxu0
        %v1024 = vadd.f32 0.0, %v1023
        %v1025 = vpop.f32.mrf.mxu0
        %v1026 = vadd.f32 0.0, %v1025
        %1027 = vdwg.mxu0
        %v1028 = vmax.f32 %v1019, 0.0
        %v1029 = vmax.f32 %v1021, 0.0
        %v1030 = vmax.f32 %v1024, 0.0
        %v1031 = vmax.f32 %v1026, 0.0
        %v1032 = vpack.c.bf16 %v1029, %v1028
        %v1033 = vpack.c.bf16 %v1031, %v1030
        %s1034 = scalar_lea.vmem %s6, 96
        %v1035 = vld [vmem:[%s1034] sm:$0xf]
        %v1036 = vld [vmem:[%s1034 + $0x4] sm:$0xf]
        %v1037 = vld [vmem:[%s1034 + $0x8] sm:$0xf]
        %v1038 = vld [vmem:[%s1034 + $0xc] sm:$0xf]
        %v1039 = vld [vmem:[%s1034 + $0x10] sm:$0xf]
        %v1040 = vld [vmem:[%s1034 + $0x14] sm:$0xf]
        %v1041 = vld [vmem:[%s1034 + $0x18] sm:$0xf]
        %v1042 = vld [vmem:[%s1034 + $0x1c] sm:$0xf]
        %v1051 = vunpack.c.l.b16 %v1035
        %v1052 = vunpack.c.l.b16 %v1036
        %v1053 = vunpack.c.l.b16 %v1037
        %v1054 = vunpack.c.l.b16 %v1038
        %v1055 = vunpack.c.l.b16 %v1039
        %v1056 = vunpack.c.l.b16 %v1040
        %v1057 = vunpack.c.l.b16 %v1041
        %v1058 = vunpack.c.l.b16 %v1042
        %v1059 = vpack.c.b16 %v1052, %v1051
        %v1060 = vpack.c.b16 %v1054, %v1053
        %v1061 = vpack.c.b16 %v1056, %v1055
        %v1062 = vpack.c.b16 %v1058, %v1057
        %v1068 = vsel %vm705, %v1032, 0
        %v1071 = vsel %vm705, %v1033, 0
        %1073 = vmatpush.bf16.msra.mxu0 0
        %1074 = vmatpush.bf16.msra.mxu0 0
        %1075 = vmatpush.bf16.msra.mxu0 0
        %1076 = vmatpush.bf16.msra.mxu0 0
        %1077 = vmatpush.bf16.msra.mxu0 %v1062
        %1078 = vmatpush.bf16.msra.mxu0 %v1061
        %1079 = vmatpush.bf16.msra.mxu0 %v1060
        %1080 = vmatpush.bf16.msra.mxu0 %v1059
        %1081 = vmatmul.bf16.gmra.mxu0 %v1068
        %v1082 = vpop.f32.mrf.mxu0
        %v1083 = vadd.f32 0.0, %v1082
        %v1084 = vpop.f32.mrf.mxu0
        %v1085 = vadd.f32 0.0, %v1084
        %1086 = vmatmul.bf16.gmra.mxu0 %v1071
        %v1087 = vpop.f32.mrf.mxu0
        %v1088 = vadd.f32 0.0, %v1087
        %v1089 = vpop.f32.mrf.mxu0
        %v1090 = vadd.f32 0.0, %v1089
        %1091 = vdwg.mxu0
        %v1092 = vadd.f32 %v934, %v1083
        %v1093 = vadd.f32 %v935, %v1085
        %v1094 = vadd.f32 %v936, %v1088
        %v1095 = vadd.f32 %v937, %v1090
        %v1096 = vmax.f32 %v1092, 0.0
        %v1097 = vmax.f32 %v1093, 0.0
        %v1098 = vmax.f32 %v1094, 0.0
        %v1099 = vmax.f32 %v1095, 0.0
        %v1100 = vld [vmem:[%s405] sm:$0xff]
        %v1101 = vld [vmem:[%s405 + $0x8] sm:$0xff]
        %v1102 = vld [vmem:[%s405 + $0x10] sm:$0xff]
        %v1103 = vld [vmem:[%s405 + $0x18] sm:$0xff]
        %v1104 = vadd.f32 %v1100, %v1096
        %v1105 = vadd.f32 %v1101, %v1097
        %v1106 = vadd.f32 %v1102, %v1098
        %v1107 = vadd.f32 %v1103, %v1099
        %1108 = vst [vmem:[%s396] sm:$0xff] %v1104
        %1109 = vst [vmem:[%s396 + $0x8] sm:$0xff] %v1105
        %1110 = vst [vmem:[%s396 + $0x10] sm:$0xff] %v1106
        %1111 = vst [vmem:[%s396 + $0x18] sm:$0xff] %v1107
        %s1112 = sand.u32 %s201, 1
        %s1113 = scalar_lea.sflag [#allocation3], %s1112
        %s1114 = sand.u32 %s201, 1
        %s1115 = smul.addr %s1114, 32
        %s1116 = scalar_lea.vmem [#allocation2], %s1115
        // Predicated region
        $region49: #{tpu_custom_call.1} parent=47 // pred_check
          %p1117 = pneg %p211
        $region50: #{tpu_custom_call.1} parent=47 // pred_check_branch
          %1119 = sbr.rel (%p1117) target = $region52
        $region51: #{tpu_custom_call.1} parent=47 // pred_region
          %s1120 = smul.u32 4, %s21
          %s1121 = ssub.s32 5, %s1120
          %p1122 = scmp.lt.s32.totalorder %s1121, 4
          %s1123 = scalar_select %p1122, %s1121, 4
          %s1124 = smul.u32 8, %s1123
          %s1125 = ssub.s32 32, %s1124
          %s1126 = sshll.u32 %s1125, 4
          %1127 = vsyncadd %s1113, %s1126
          %p1128 = scmp.ne.s32.totalorder 0, %s1124
          %s1129 = smul.addr %s1120, 8
          %s1130 = scalar_lea.hbm %s7, %s1129
          %s1131 = smul.u32 8, %s1123
          %s1132 = sshll.u32 %s1116, 4
          %s1133 = int_to_ptr.vmem [resolvable:$true] %s1132
          %s1134 = sshll.u32 %s1130, 4
          %s1135 = int_to_ptr.hbm [resolvable:$true] %s1134
          %s1136 = sshll.u32 %s1131, 4
          %1140 = dma.vmem_to_hbm [thread:$0]  (%p1128), %s1133, %s1136, %s1135, %s1113, 128, 128, 8
        $region52: #{tpu_custom_call.1} parent=47 // pred_fallthru
          _
      $region48: #{tpu_custom_call.1} parent=5 // pred_fallthru
        _
      %p1141 = scmp.le.s32.totalorder 2, %s16
      // Predicated region
      $region53: #{tpu_custom_call.1} parent=5 // pred_check
        %p1142 = pneg %p1141
      $region54: #{tpu_custom_call.1} parent=5 // pred_check_branch
        %1144 = sbr.rel (%p1142) target = $region56
      $region55: #{tpu_custom_call.1} parent=5 // pred_region
        %s1145 = ssub.s32 %s16, 2
        // Predicated region
        $region57: #{tpu_custom_call.1} parent=55 // pred_check
          %p1146 = pneg %p217
        $region58: #{tpu_custom_call.1} parent=55 // pred_check_branch
          %1148 = sbr.rel (%p1146) target = $region60
        $region59: #{tpu_custom_call.1} parent=55 // pred_region
          %s1149 = sand.u32 %s202, 1
          %s1150 = scalar_lea.sflag [#allocation3], %s1149
          %s1151 = sand.u32 %s202, 1
          %s1152 = smul.addr %s1151, 32
          %s1153 = scalar_lea.vmem [#allocation2], %s1152
          %1155 = dma.done %s1150, 512
        $region60: #{tpu_custom_call.1} parent=55 // pred_fallthru
          _
      $region56: #{tpu_custom_call.1} parent=5 // pred_fallthru
        _
    $region6: #{tpu_custom_call.1} parent=1 // loop_footer
      %s20 = sadd.s32 1, %s16
    $region7: #{tpu_custom_call.1} parent=1 // loop_footer_branch
      %15 = sbr.rel target = $region3
    $region8: #{tpu_custom_call.1} parent=1 // loop_exit
      _
    %1156 = vsyncpa [#allocation3], 1
    %s1157 = scalar_lea.sflag [#allocation3], 1
    %1158 = vsyncpa %s1157, 1

// kernel: tpu_custom_call.1
$region0: #{tpu_custom_call.1}
  #allocation0 [shape = 'u32[]', space=smem, size = 0x4, offset = 0x4, fixed_abs, tag = 'smem constant byte address 0x4 - core index']
  #allocation1 [shape = 'u32[72,128]{1,0:T(1,128)}', space=vmem, size = 0x9000, scoped, tag = 'internal scratch']
  %s0 = inlined_call_operand.vmem [shape: f32[34,128], index: 0, kind: input, shape index: {}]
  %s1 = inlined_call_operand.vmem [shape: f32[34,128], index: 1, kind: input, shape index: {}]
  %s2 = inlined_call_operand.vmem [shape: f32[34,128], index: 2, kind: input, shape index: {}]
  %s3 = inlined_call_operand.vmem [shape: f32[34,128], index: 3, kind: input, shape index: {}]
  %s4 = inlined_call_operand.vmem [shape: f32[34,128], index: 4, kind: input, shape index: {}]
  %s5 = inlined_call_operand.vmem [shape: bf16[4,128,64], index: 5, kind: input, shape index: {}]
  %s6 = inlined_call_operand.vmem [shape: bf16[4,64,128], index: 6, kind: input, shape index: {}]
  %s7 = inlined_call_operand.hbm [shape: f32[34,128], index: 7, kind: output, shape index: {}]
  %s8 = sld [smem:[#allocation0]]
  $region61: #{tpu_custom_call.1} parent=0
    _
  %s10 = ssub.s32 1, %s8
  %s11 = scalar_select 0, %s10, %s8
  $region1: #{tpu_custom_call.1} parent=0
    #allocation2 [shape = 'u8[32768]{0}', space=vmem, size = 0x8000, scoped, tag = 'output window, operand 0']
    #allocation3 [shape = 's32[2]{0}', space=sflag, size = 0x8, scoped, tag = 'scoped memory for tpu_custom_call.1']
    %12 = vsyncpa [#allocation3], 0
    %s13 = scalar_lea.sflag [#allocation3], 1
    %14 = vsyncpa %s13, 0
    loop: start=0, step=1, limit=4
    $region2: #{tpu_custom_call.1} parent=1 // loop_pre_header
      _
    $region3: #{tpu_custom_call.1} parent=1 // loop_header
      %s16 = sphi 0, %s20
      %p17 = scmp.ge.s32.totalorder %s16, 4
      %s26 = sphi 0, %s28
      %s29 = sphi 0, %s26
      %s30 = sphi 0, %s29
      %s46 = sphi 0, %s30
      %s52 = sphi 0, %s54
      %s55 = sphi 0, %s52
      %s56 = sphi 0, %s55
      %s72 = sphi 0, %s56
      %s78 = sphi 0, %s80
      %s81 = sphi 0, %s78
      %s82 = sphi 0, %s81
      %s98 = sphi 0, %s82
      %s104 = sphi 0, %s106
      %s107 = sphi 0, %s104
      %s108 = sphi 0, %s107
      %s124 = sphi 0, %s108
      %s130 = sphi 0, %s132
      %s133 = sphi 0, %s130
      %s134 = sphi 0, %s133
      %s150 = sphi 0, %s134
      %s154 = sphi 0, %s154
      %s156 = sphi 0, %s154
      %s157 = sphi 0, %s156
      %s171 = sphi 0, %s157
      %s175 = sphi 0, %s175
      %s177 = sphi 0, %s175
      %s178 = sphi 0, %s177
      %s192 = sphi 0, %s178
      %s198 = sphi 0, %s200
      %s201 = sphi 0, %s198
      %s202 = sphi 0, %s201
      %s218 = sphi 0, %s202
    $region4: #{tpu_custom_call.1} parent=1 // loop_header_branch
      %19 = sbr.rel (%p17) target = $region8
    $region5: #{tpu_custom_call.1} parent=1 // loop_body
      %s21 = ssub.s32 %s16, 1
      %s22 = ssub.s32 %s16, 2
      %s23 = sadd.s32 %s16, 1
      %s24 = ssub.s32 %s16, %s23
      %p25 = scmp.eq.s32.totalorder %s24, 0
      %s27 = sadd.s32 %s26, 1
      %s28 = scalar_select %p25, %s26, %s27
      %p31 = pneg %p25
      %p32 = scmp.eq.s32.totalorder %s16, 1
      %p33 = por %p31, %p32
      %p34 = scmp.ne.s32.totalorder %s26, %s29
      %p35 = scmp.eq.s32.totalorder %s16, 0
      %p36 = por %p34, %p35
      %p37 = scmp.ne.s32.totalorder %s26, %s29
      %p38 = scmp.eq.s32.totalorder %s21, 1
      %p39 = por %p37, %p38
      %p40 = scmp.ne.s32.totalorder %s29, %s30
      %p41 = scmp.eq.s32.totalorder %s21, 0
      %p42 = por %p40, %p41
      %p43 = scmp.ne.s32.totalorder %s29, %s30
      %p44 = scmp.eq.s32.totalorder %s22, 1
      %p45 = por %p43, %p44
      %p47 = scmp.ne.s32.totalorder %s30, %s46
      %p48 = scmp.eq.s32.totalorder %s22, 0
      %p49 = por %p47, %p48
      %s50 = ssub.s32 %s16, %s23
      %p51 = scmp.eq.s32.totalorder %s50, 0
      %s53 = sadd.s32 %s52, 1
      %s54 = scalar_select %p51, %s52, %s53
      %p57 = pneg %p51
      %p58 = scmp.eq.s32.totalorder %s16, 1
      %p59 = por %p57, %p58
      %p60 = scmp.ne.s32.totalorder %s52, %s55
      %p61 = scmp.eq.s32.totalorder %s16, 0
      %p62 = por %p60, %p61
      %p63 = scmp.ne.s32.totalorder %s52, %s55
      %p64 = scmp.eq.s32.totalorder %s21, 1
      %p65 = por %p63, %p64
      %p66 = scmp.ne.s32.totalorder %s55, %s56
      %p67 = scmp.eq.s32.totalorder %s21, 0
      %p68 = por %p66, %p67
      %p69 = scmp.ne.s32.totalorder %s55, %s56
      %p70 = scmp.eq.s32.totalorder %s22, 1
      %p71 = por %p69, %p70
      %p73 = scmp.ne.s32.totalorder %s56, %s72
      %p74 = scmp.eq.s32.totalorder %s22, 0
      %p75 = por %p73, %p74
      %s76 = ssub.s32 %s16, %s23
      %p77 = scmp.eq.s32.totalorder %s76, 0
      %s79 = sadd.s32 %s78, 1
      %s80 = scalar_select %p77, %s78, %s79
      %p83 = pneg %p77
      %p84 = scmp.eq.s32.totalorder %s16, 1
      %p85 = por %p83, %p84
      %p86 = scmp.ne.s32.totalorder %s78, %s81
      %p87 = scmp.eq.s32.totalorder %s16, 0
      %p88 = por %p86, %p87
      %p89 = scmp.ne.s32.totalorder %s78, %s81
      %p90 = scmp.eq.s32.totalorder %s21, 1
      %p91 = por %p89, %p90
      %p92 = scmp.ne.s32.totalorder %s81, %s82
      %p93 = scmp.eq.s32.totalorder %s21, 0
      %p94 = por %p92, %p93
      %p95 = scmp.ne.s32.totalorder %s81, %s82
      %p96 = scmp.eq.s32.totalorder %s22, 1
      %p97 = por %p95, %p96
      %p99 = scmp.ne.s32.totalorder %s82, %s98
      %p100 = scmp.eq.s32.totalorder %s22, 0
      %p101 = por %p99, %p100
      %s102 = ssub.s32 %s16, %s23
      %p103 = scmp.eq.s32.totalorder %s102, 0
      %s105 = sadd.s32 %s104, 1
      %s106 = scalar_select %p103, %s104, %s105
      %p109 = pneg %p103
      %p110 = scmp.eq.s32.totalorder %s16, 1
      %p111 = por %p109, %p110
      %p112 = scmp.ne.s32.totalorder %s104, %s107
      %p113 = scmp.eq.s32.totalorder %s16, 0
      %p114 = por %p112, %p113
      %p115 = scmp.ne.s32.totalorder %s104, %s107
      %p116 = scmp.eq.s32.totalorder %s21, 1
      %p117 = por %p115, %p116
      %p118 = scmp.ne.s32.totalorder %s107, %s108
      %p119 = scmp.eq.s32.totalorder %s21, 0
      %p120 = por %p118, %p119
      %p121 = scmp.ne.s32.totalorder %s107, %s108
      %p122 = scmp.eq.s32.totalorder %s22, 1
      %p123 = por %p121, %p122
      %p125 = scmp.ne.s32.totalorder %s108, %s124
      %p126 = scmp.eq.s32.totalorder %s22, 0
      %p127 = por %p125, %p126
      %s128 = ssub.s32 %s16, %s23
      %p129 = scmp.eq.s32.totalorder %s128, 0
      %s131 = sadd.s32 %s130, 1
      %s132 = scalar_select %p129, %s130, %s131
      %p135 = pneg %p129
      %p136 = scmp.eq.s32.totalorder %s16, 1
      %p137 = por %p135, %p136
      %p138 = scmp.ne.s32.totalorder %s130, %s133
      %p139 = scmp.eq.s32.totalorder %s16, 0
      %p140 = por %p138, %p139
      %p141 = scmp.ne.s32.totalorder %s130, %s133
      %p142 = scmp.eq.s32.totalorder %s21, 1
      %p143 = por %p141, %p142
      %p144 = scmp.ne.s32.totalorder %s133, %s134
      %p145 = scmp.eq.s32.totalorder %s21, 0
      %p146 = por %p144, %p145
      %p147 = scmp.ne.s32.totalorder %s133, %s134
      %p148 = scmp.eq.s32.totalorder %s22, 1
      %p149 = por %p147, %p148
      %p151 = scmp.ne.s32.totalorder %s134, %s150
      %p152 = scmp.eq.s32.totalorder %s22, 0
      %p153 = por %p151, %p152
      %s155 = sadd.s32 %s154, 1
      %p158 = scmp.eq.s32.totalorder %s16, 1
      %p159 = scmp.ne.s32.totalorder %s154, %s156
      %p160 = scmp.eq.s32.totalorder %s16, 0
      %p161 = por %p159, %p160
      %p162 = scmp.ne.s32.totalorder %s154, %s156
      %p163 = scmp.eq.s32.totalorder %s21, 1
      %p164 = por %p162, %p163
      %p165 = scmp.ne.s32.totalorder %s156, %s157
      %p166 = scmp.eq.s32.totalorder %s21, 0
      %p167 = por %p165, %p166
      %p168 = scmp.ne.s32.totalorder %s156, %s157
      %p169 = scmp.eq.s32.totalorder %s22, 1
      %p170 = por %p168, %p169
      %p172 = scmp.ne.s32.totalorder %s157, %s171
      %p173 = scmp.eq.s32.totalorder %s22, 0
      %p174 = por %p172, %p173
      %s176 = sadd.s32 %s175, 1
      %p179 = scmp.eq.s32.totalorder %s16, 1
      %p180 = scmp.ne.s32.totalorder %s175, %s177
      %p181 = scmp.eq.s32.totalorder %s16, 0
      %p182 = por %p180, %p181
      %p183 = scmp.ne.s32.totalorder %s175, %s177
      %p184 = scmp.eq.s32.totalorder %s21, 1
      %p185 = por %p183, %p184
      %p186 = scmp.ne.s32.totalorder %s177, %s178
      %p187 = scmp.eq.s32.totalorder %s21, 0
      %p188 = por %p186, %p187
      %p189 = scmp.ne.s32.totalorder %s177, %s178
      %p190 = scmp.eq.s32.totalorder %s22, 1
      %p191 = por %p189, %p190
      %p193 = scmp.ne.s32.totalorder %s178, %s192
      %p194 = scmp.eq.s32.totalorder %s22, 0
      %p195 = por %p193, %p194
      %s196 = ssub.s32 %s16, %s23
      %p197 = scmp.eq.s32.totalorder %s196, 0
      %s199 = sadd.s32 %s198, 1
      %s200 = scalar_select %p197, %s198, %s199
      %p203 = pneg %p197
      %p204 = scmp.eq.s32.totalorder %s16, 1
      %p205 = por %p203, %p204
      %p206 = scmp.ne.s32.totalorder %s198, %s201
      %p207 = scmp.eq.s32.totalorder %s16, 0
      %p208 = por %p206, %p207
      %p209 = scmp.ne.s32.totalorder %s198, %s201
      %p210 = scmp.eq.s32.totalorder %s21, 1
      %p211 = por %p209, %p210
      %p212 = scmp.ne.s32.totalorder %s201, %s202
      %p213 = scmp.eq.s32.totalorder %s21, 0
      %p214 = por %p212, %p213
      %p215 = scmp.ne.s32.totalorder %s201, %s202
      %p216 = scmp.eq.s32.totalorder %s22, 1
      %p217 = por %p215, %p216
      %p219 = scmp.ne.s32.totalorder %s202, %s218
      %p220 = scmp.eq.s32.totalorder %s22, 0
      %p221 = por %p219, %p220
      %p222 = scmp.le.s32.totalorder 1, %s16
      %p223 = scmp.lt.s32.totalorder %s16, 3
      %p224 = pnand %p222, %p223
      %p225 = pneg %p224
      // Predicated region
      $region9: #{tpu_custom_call.1} parent=5 // pred_check
        _
      $region10: #{tpu_custom_call.1} parent=5 // pred_check_branch
        %227 = sbr.rel (%p224) target = $region12
      $region11: #{tpu_custom_call.1} parent=5 // pred_region
        %s228 = ssub.s32 %s16, 1
        // Predicated region
        $region13: #{tpu_custom_call.1} parent=11 // pred_check
          %p229 = pneg %p167
        $region14: #{tpu_custom_call.1} parent=11 // pred_check_branch
          %231 = sbr.rel (%p229) target = $region16
        $region15: #{tpu_custom_call.1} parent=11 // pred_region
          _
        $region16: #{tpu_custom_call.1} parent=11 // pred_fallthru
          _
        // Predicated region
        $region17: #{tpu_custom_call.1} parent=11 // pred_check
          %p232 = pneg %p188
        $region18: #{tpu_custom_call.1} parent=11 // pred_check_branch
          %234 = sbr.rel (%p232) target = $region20
        $region19: #{tpu_custom_call.1} parent=11 // pred_region
          _
        $region20: #{tpu_custom_call.1} parent=11 // pred_fallthru
          _
      $region12: #{tpu_custom_call.1} parent=5 // pred_fallthru
        _
      %p235 = scmp.lt.s32.totalorder %s16, 2
      // Predicated region
      $region21: #{tpu_custom_call.1} parent=5 // pred_check
        %p236 = pneg %p235
      $region22: #{tpu_custom_call.1} parent=5 // pred_check_branch
        %238 = sbr.rel (%p236) target = $region24
      $region23: #{tpu_custom_call.1} parent=5 // pred_region
        // Predicated region
        $region25: #{tpu_custom_call.1} parent=23 // pred_check
          %p239 = pneg %p36
        $region26: #{tpu_custom_call.1} parent=23 // pred_check_branch
          %241 = sbr.rel (%p239) target = $region28
        $region27: #{tpu_custom_call.1} parent=23 // pred_region
          %s242 = smul.u32 4, %s16
          %s243 = ssub.s32 5, %s242
          %p244 = scmp.lt.s32.totalorder %s243, 4
          %s245 = scalar_select %p244, %s243, 4
          %s246 = smul.u32 8, %s245
          %p247 = scmp.lt.s32.totalorder %s242, 4
          %s248 = scalar_select %p247, %s242, 4
          %s249 = smul.addr %s248, 8
          %s250 = scalar_lea.vmem %s0, %s249
          %s251 = smul.u32 4, %s16
          %s252 = ssub.s32 5, %s251
          %p253 = scmp.lt.s32.totalorder %s252, 4
          %s254 = scalar_select %p253, %s252, 4
          %s255 = smul.u32 8, %s254
        $region28: #{tpu_custom_call.1} parent=23 // pred_fallthru
          _
        // Predicated region
        $region29: #{tpu_custom_call.1} parent=23 // pred_check
          %p256 = pneg %p62
        $region30: #{tpu_custom_call.1} parent=23 // pred_check_branch
          %258 = sbr.rel (%p256) target = $region32
        $region31: #{tpu_custom_call.1} parent=23 // pred_region
          %s259 = smul.u32 4, %s16
          %s260 = ssub.s32 5, %s259
          %p261 = scmp.lt.s32.totalorder %s260, 4
          %s262 = scalar_select %p261, %s260, 4
          %s263 = smul.u32 8, %s262
          %p264 = scmp.lt.s32.totalorder %s259, 4
          %s265 = scalar_select %p264, %s259, 4
          %s266 = smul.addr %s265, 8
          %s267 = scalar_lea.vmem %s1, %s266
          %s268 = smul.u32 4, %s16
          %s269 = ssub.s32 5, %s268
          %p270 = scmp.lt.s32.totalorder %s269, 4
          %s271 = scalar_select %p270, %s269, 4
          %s272 = smul.u32 8, %s271
        $region32: #{tpu_custom_call.1} parent=23 // pred_fallthru
          _
        // Predicated region
        $region33: #{tpu_custom_call.1} parent=23 // pred_check
          %p273 = pneg %p88
        $region34: #{tpu_custom_call.1} parent=23 // pred_check_branch
          %275 = sbr.rel (%p273) target = $region36
        $region35: #{tpu_custom_call.1} parent=23 // pred_region
          %s276 = smul.u32 4, %s16
          %s277 = ssub.s32 5, %s276
          %p278 = scmp.lt.s32.totalorder %s277, 4
          %s279 = scalar_select %p278, %s277, 4
          %s280 = smul.u32 8, %s279
          %p281 = scmp.lt.s32.totalorder %s276, 4
          %s282 = scalar_select %p281, %s276, 4
          %s283 = smul.addr %s282, 8
          %s284 = scalar_lea.vmem %s2, %s283
          %s285 = smul.u32 4, %s16
          %s286 = ssub.s32 5, %s285
          %p287 = scmp.lt.s32.totalorder %s286, 4
          %s288 = scalar_select %p287, %s286, 4
          %s289 = smul.u32 8, %s288
        $region36: #{tpu_custom_call.1} parent=23 // pred_fallthru
          _
        // Predicated region
        $region37: #{tpu_custom_call.1} parent=23 // pred_check
          %p290 = pneg %p114
        $region38: #{tpu_custom_call.1} parent=23 // pred_check_branch
          %292 = sbr.rel (%p290) target = $region40
        $region39: #{tpu_custom_call.1} parent=23 // pred_region
          %s293 = smul.u32 4, %s16
          %s294 = ssub.s32 5, %s293
          %p295 = scmp.lt.s32.totalorder %s294, 4
          %s296 = scalar_select %p295, %s294, 4
          %s297 = smul.u32 8, %s296
          %p298 = scmp.lt.s32.totalorder %s293, 4
          %s299 = scalar_select %p298, %s293, 4
          %s300 = smul.addr %s299, 8
          %s301 = scalar_lea.vmem %s3, %s300
          %s302 = smul.u32 4, %s16
          %s303 = ssub.s32 5, %s302
          %p304 = scmp.lt.s32.totalorder %s303, 4
          %s305 = scalar_select %p304, %s303, 4
          %s306 = smul.u32 8, %s305
        $region40: #{tpu_custom_call.1} parent=23 // pred_fallthru
          _
        // Predicated region
        $region41: #{tpu_custom_call.1} parent=23 // pred_check
          %p307 = pneg %p140
        $region42: #{tpu_custom_call.1} parent=23 // pred_check_branch
          %309 = sbr.rel (%p307) target = $region44
        $region43: #{tpu_custom_call.1} parent=23 // pred_region
          %s310 = smul.u32 4, %s16
          %s311 = ssub.s32 5, %s310
          %p312 = scmp.lt.s32.totalorder %s311, 4
          %s313 = scalar_select %p312, %s311, 4
          %s314 = smul.u32 8, %s313
          %p315 = scmp.lt.s32.totalorder %s310, 4
          %s316 = scalar_select %p315, %s310, 4
          %s317 = smul.addr %s316, 8
          %s318 = scalar_lea.vmem %s4, %s317
          %s319 = smul.u32 4, %s16
          %s320 = ssub.s32 5, %s319
          %p321 = scmp.lt.s32.totalorder %s320, 4
          %s322 = scalar_select %p321, %s320, 4
          %s323 = smul.u32 8, %s322
        $region44: #{tpu_custom_call.1} parent=23 // pred_fallthru
          _
      $region24: #{tpu_custom_call.1} parent=5 // pred_fallthru
        _
      %p324 = scmp.le.s32.totalorder 1, %s16
      %p325 = scmp.lt.s32.totalorder %s16, 3
      %p326 = pnand %p324, %p325
      %p327 = pneg %p326
      // Predicated region
      $region45: #{tpu_custom_call.1} parent=5 // pred_check
        _
      $region46: #{tpu_custom_call.1} parent=5 // pred_check_branch
        %329 = sbr.rel (%p326) target = $region48
      $region47: #{tpu_custom_call.1} parent=5 // pred_region
        %s330 = ssub.s32 %s16, 1
        %s331 = smul.u32 4, %s21
        %s332 = ssub.s32 5, %s331
        %p333 = scmp.lt.s32.totalorder %s332, 4
        %s334 = scalar_select %p333, %s332, 4
        %s335 = smul.u32 8, %s334
        %p336 = scmp.lt.s32.totalorder %s331, 4
        %s337 = scalar_select %p336, %s331, 4
        %s338 = smul.addr %s337, 8
        %s339 = scalar_lea.vmem %s0, %s338
        %p340 = pneg %p42
        %p341 = pneg %p39
        %s342 = smul.u32 4, %s21
        %s343 = ssub.s32 5, %s342
        %p344 = scmp.lt.s32.totalorder %s343, 4
        %s345 = scalar_select %p344, %s343, 4
        %s346 = smul.u32 8, %s345
        %p347 = scmp.lt.s32.totalorder %s342, 4
        %s348 = scalar_select %p347, %s342, 4
        %s349 = smul.addr %s348, 8
        %s350 = scalar_lea.vmem %s1, %s349
        %p351 = pneg %p68
        %p352 = pneg %p65
        %s353 = smul.u32 4, %s21
        %s354 = ssub.s32 5, %s353
        %p355 = scmp.lt.s32.totalorder %s354, 4
        %s356 = scalar_select %p355, %s354, 4
        %s357 = smul.u32 8, %s356
        %p358 = scmp.lt.s32.totalorder %s353, 4
        %s359 = scalar_select %p358, %s353, 4
        %s360 = smul.addr %s359, 8
        %s361 = scalar_lea.vmem %s2, %s360
        %p362 = pneg %p94
        %p363 = pneg %p91
        %s364 = smul.u32 4, %s21
        %s365 = ssub.s32 5, %s364
        %p366 = scmp.lt.s32.totalorder %s365, 4
        %s367 = scalar_select %p366, %s365, 4
        %s368 = smul.u32 8, %s367
        %p369 = scmp.lt.s32.totalorder %s364, 4
        %s370 = scalar_select %p369, %s364, 4
        %s371 = smul.addr %s370, 8
        %s372 = scalar_lea.vmem %s3, %s371
        %p373 = pneg %p120
        %p374 = pneg %p117
        %s375 = smul.u32 4, %s21
        %s376 = ssub.s32 5, %s375
        %p377 = scmp.lt.s32.totalorder %s376, 4
        %s378 = scalar_select %p377, %s376, 4
        %s379 = smul.u32 8, %s378
        %p380 = scmp.lt.s32.totalorder %s375, 4
        %s381 = scalar_select %p380, %s375, 4
        %s382 = smul.addr %s381, 8
        %s383 = scalar_lea.vmem %s4, %s382
        %p384 = pneg %p146
        %p385 = pneg %p143
        %p386 = pneg %p167
        %p387 = pneg %p164
        %p388 = pneg %p188
        %p389 = pneg %p185
        %p390 = pneg %p214
        %p391 = pneg %p211
        %s392 = sand.u32 %s201, 1
        %s393 = scalar_lea.sflag [#allocation3], %s392
        %s394 = sand.u32 %s201, 1
        %s395 = smul.addr %s394, 32
        %s396 = scalar_lea.vmem [#allocation2], %s395
        %s397 = smul.u32 4, %s21
        %s398 = ssub.s32 5, %s397
        %p399 = scmp.lt.s32.totalorder %s398, 4
        %s400 = scalar_select %p399, %s398, 4
        %s401 = smul.u32 8, %s400
        %p402 = scmp.lt.s32.totalorder %s397, 4
        %s403 = scalar_select %p402, %s397, 4
        %s404 = smul.addr %s403, 8
        %s405 = scalar_lea.vmem %s0, %s404
        %s406 = smul.u32 4, %s21
        %s407 = ssub.s32 5, %s406
        %p408 = scmp.lt.s32.totalorder %s407, 4
        %s409 = scalar_select %p408, %s407, 4
        %s410 = smul.u32 8, %s409
        %s411 = smul.u32 4, %s21
        %s412 = ssub.s32 5, %s411
        %p413 = scmp.lt.s32.totalorder %s412, 4
        %s414 = scalar_select %p413, %s412, 4
        %s415 = smul.u32 8, %s414
        %p416 = scmp.lt.s32.totalorder %s411, 4
        %s417 = scalar_select %p416, %s411, 4
        %s418 = smul.addr %s417, 8
        %s419 = scalar_lea.vmem %s1, %s418
        %s420 = smul.u32 4, %s21
        %s421 = ssub.s32 5, %s420
        %p422 = scmp.lt.s32.totalorder %s421, 4
        %s423 = scalar_select %p422, %s421, 4
        %s424 = smul.u32 8, %s423
        %s425 = smul.u32 4, %s21
        %s426 = ssub.s32 5, %s425
        %p427 = scmp.lt.s32.totalorder %s426, 4
        %s428 = scalar_select %p427, %s426, 4
        %s429 = smul.u32 8, %s428
        %p430 = scmp.lt.s32.totalorder %s425, 4
        %s431 = scalar_select %p430, %s425, 4
        %s432 = smul.addr %s431, 8
        %s433 = scalar_lea.vmem %s2, %s432
        %s434 = smul.u32 4, %s21
        %s435 = ssub.s32 5, %s434
        %p436 = scmp.lt.s32.totalorder %s435, 4
        %s437 = scalar_select %p436, %s435, 4
        %s438 = smul.u32 8, %s437
        %s439 = smul.u32 4, %s21
        %s440 = ssub.s32 5, %s439
        %p441 = scmp.lt.s32.totalorder %s440, 4
        %s442 = scalar_select %p441, %s440, 4
        %s443 = smul.u32 8, %s442
        %p444 = scmp.lt.s32.totalorder %s439, 4
        %s445 = scalar_select %p444, %s439, 4
        %s446 = smul.addr %s445, 8
        %s447 = scalar_lea.vmem %s3, %s446
        %s448 = smul.u32 4, %s21
        %s449 = ssub.s32 5, %s448
        %p450 = scmp.lt.s32.totalorder %s449, 4
        %s451 = scalar_select %p450, %s449, 4
        %s452 = smul.u32 8, %s451
        %s453 = smul.u32 4, %s21
        %s454 = ssub.s32 5, %s453
        %p455 = scmp.lt.s32.totalorder %s454, 4
        %s456 = scalar_select %p455, %s454, 4
        %s457 = smul.u32 8, %s456
        %p458 = scmp.lt.s32.totalorder %s453, 4
        %s459 = scalar_select %p458, %s453, 4
        %s460 = smul.addr %s459, 8
        %s461 = scalar_lea.vmem %s4, %s460
        %s462 = smul.u32 4, %s21
        %s463 = ssub.s32 5, %s462
        %p464 = scmp.lt.s32.totalorder %s463, 4
        %s465 = scalar_select %p464, %s463, 4
        %s466 = smul.u32 8, %s465
        %s467 = smul.u32 4, %s21
        %s468 = ssub.s32 5, %s467
        %p469 = scmp.lt.s32.totalorder %s468, 4
        %s470 = scalar_select %p469, %s468, 4
        %s471 = smul.u32 8, %s470
        %v473 = vld [vmem:[%s419] sm:$0xff]
        %v474 = vld [vmem:[%s419 + $0x8] sm:$0xff]
        %v475 = vld [vmem:[%s419 + $0x10] sm:$0xff]
        %v476 = vld [vmem:[%s419 + $0x18] sm:$0xff]
        %v477 = vpack.c.bf16 %v474, %v473
        %v478 = vpack.c.bf16 %v476, %v475
        %v479 = vld [vmem:[%s5] sm:$0xf]
        %v480 = vld [vmem:[%s5 + $0x4] sm:$0xf]
        %v481 = vld [vmem:[%s5 + $0x8] sm:$0xf]
        %v482 = vld [vmem:[%s5 + $0xc] sm:$0xf]
        %v483 = vld [vmem:[%s5 + $0x10] sm:$0xf]
        %v484 = vld [vmem:[%s5 + $0x14] sm:$0xf]
        %v485 = vld [vmem:[%s5 + $0x18] sm:$0xf]
        %v486 = vld [vmem:[%s5 + $0x1c] sm:$0xf]
        %v487 = vld [vmem:[%s5 + $0x20] sm:$0xf]
        %v488 = vld [vmem:[%s5 + $0x24] sm:$0xf]
        %v489 = vld [vmem:[%s5 + $0x28] sm:$0xf]
        %v490 = vld [vmem:[%s5 + $0x2c] sm:$0xf]
        %v491 = vld [vmem:[%s5 + $0x30] sm:$0xf]
        %v492 = vld [vmem:[%s5 + $0x34] sm:$0xf]
        %v493 = vld [vmem:[%s5 + $0x38] sm:$0xf]
        %v494 = vld [vmem:[%s5 + $0x3c] sm:$0xf]
        %v511 = vunpack.c.l.b16 %v479
        %v512 = vunpack.c.l.b16 %v480
        %v513 = vunpack.c.l.b16 %v481
        %v514 = vunpack.c.l.b16 %v482
        %v515 = vunpack.c.l.b16 %v483
        %v516 = vunpack.c.l.b16 %v484
        %v517 = vunpack.c.l.b16 %v485
        %v518 = vunpack.c.l.b16 %v486
        %v519 = vunpack.c.l.b16 %v487
        %v520 = vunpack.c.l.b16 %v488
        %v521 = vunpack.c.l.b16 %v489
        %v522 = vunpack.c.l.b16 %v490
        %v523 = vunpack.c.l.b16 %v491
        %v524 = vunpack.c.l.b16 %v492
        %v525 = vunpack.c.l.b16 %v493
        %v526 = vunpack.c.l.b16 %v494
        %v527 = vpack.c.b16 %v512, %v511
        %v528 = vpack.c.b16 %v514, %v513
        %v529 = vpack.c.b16 %v516, %v515
        %v530 = vpack.c.b16 %v518, %v517
        %v531 = vpack.c.b16 %v520, %v519
        %v532 = vpack.c.b16 %v522, %v521
        %v533 = vpack.c.b16 %v524, %v523
        %v534 = vpack.c.b16 %v526, %v525
        %543 = vmatpush.bf16.msra.mxu0 %v534
        %544 = vmatpush.bf16.msra.mxu0 %v533
        %545 = vmatpush.bf16.msra.mxu0 %v532
        %546 = vmatpush.bf16.msra.mxu0 %v531
        %547 = vmatpush.bf16.msra.mxu0 %v530
        %548 = vmatpush.bf16.msra.mxu0 %v529
        %549 = vmatpush.bf16.msra.mxu0 %v528
        %550 = vmatpush.bf16.msra.mxu0 %v527
        %551 = vmatmul.bf16.gmra.mxu0 %v477
        %v552 = vpop.f32.mrf.mxu0
        %v553 = vadd.f32 0.0, %v552
        %v554 = vpop.f32.mrf.mxu0
        %v555 = vadd.f32 0.0, %v554
        %556 = vmatmul.bf16.gmra.mxu0 %v478
        %v557 = vpop.f32.mrf.mxu0
        %v558 = vadd.f32 0.0, %v557
        %v559 = vpop.f32.mrf.mxu0
        %v560 = vadd.f32 0.0, %v559
        %561 = vdwg.mxu0
        %v562 = vmax.f32 %v553, 0.0
        %v563 = vmax.f32 %v555, 0.0
        %v564 = vmax.f32 %v558, 0.0
        %v565 = vmax.f32 %v560, 0.0
        %v566 = vpack.c.bf16 %v563, %v562
        %v567 = vpack.c.bf16 %v565, %v564
        %v568 = vld [vmem:[%s6] sm:$0xf]
        %v569 = vld [vmem:[%s6 + $0x4] sm:$0xf]
        %v570 = vld [vmem:[%s6 + $0x8] sm:$0xf]
        %v571 = vld [vmem:[%s6 + $0xc] sm:$0xf]
        %v572 = vld [vmem:[%s6 + $0x10] sm:$0xf]
        %v573 = vld [vmem:[%s6 + $0x14] sm:$0xf]
        %v574 = vld [vmem:[%s6 + $0x18] sm:$0xf]
        %v575 = vld [vmem:[%s6 + $0x1c] sm:$0xf]
        %v576 = vld [vmem:[%s433] sm:$0xff]
        %v577 = vld [vmem:[%s433 + $0x8] sm:$0xff]
        %v578 = vld [vmem:[%s433 + $0x10] sm:$0xff]
        %v579 = vld [vmem:[%s433 + $0x18] sm:$0xff]
        %v580 = vpack.c.bf16 %v577, %v576
        %v581 = vpack.c.bf16 %v579, %v578
        %s582 = scalar_lea.vmem %s5, 64
        %v583 = vld [vmem:[%s582] sm:$0xf]
        %v584 = vld [vmem:[%s582 + $0x4] sm:$0xf]
        %v585 = vld [vmem:[%s582 + $0x8] sm:$0xf]
        %v586 = vld [vmem:[%s582 + $0xc] sm:$0xf]
        %v587 = vld [vmem:[%s582 + $0x10] sm:$0xf]
        %v588 = vld [vmem:[%s582 + $0x14] sm:$0xf]
        %v589 = vld [vmem:[%s582 + $0x18] sm:$0xf]
        %v590 = vld [vmem:[%s582 + $0x1c] sm:$0xf]
        %v591 = vld [vmem:[%s582 + $0x20] sm:$0xf]
        %v592 = vld [vmem:[%s582 + $0x24] sm:$0xf]
        %v593 = vld [vmem:[%s582 + $0x28] sm:$0xf]
        %v594 = vld [vmem:[%s582 + $0x2c] sm:$0xf]
        %v595 = vld [vmem:[%s582 + $0x30] sm:$0xf]
        %v596 = vld [vmem:[%s582 + $0x34] sm:$0xf]
        %v597 = vld [vmem:[%s582 + $0x38] sm:$0xf]
        %v598 = vld [vmem:[%s582 + $0x3c] sm:$0xf]
        %v615 = vunpack.c.l.b16 %v583
        %v616 = vunpack.c.l.b16 %v584
        %v617 = vunpack.c.l.b16 %v585
        %v618 = vunpack.c.l.b16 %v586
        %v619 = vunpack.c.l.b16 %v587
        %v620 = vunpack.c.l.b16 %v588
        %v621 = vunpack.c.l.b16 %v589
        %v622 = vunpack.c.l.b16 %v590
        %v623 = vunpack.c.l.b16 %v591
        %v624 = vunpack.c.l.b16 %v592
        %v625 = vunpack.c.l.b16 %v593
        %v626 = vunpack.c.l.b16 %v594
        %v627 = vunpack.c.l.b16 %v595
        %v628 = vunpack.c.l.b16 %v596
        %v629 = vunpack.c.l.b16 %v597
        %v630 = vunpack.c.l.b16 %v598
        %v631 = vpack.c.b16 %v616, %v615
        %v632 = vpack.c.b16 %v618, %v617
        %v633 = vpack.c.b16 %v620, %v619
        %v634 = vpack.c.b16 %v622, %v621
        %v635 = vpack.c.b16 %v624, %v623
        %v636 = vpack.c.b16 %v626, %v625
        %v637 = vpack.c.b16 %v628, %v627
        %v638 = vpack.c.b16 %v630, %v629
        %647 = vmatpush.bf16.msra.mxu0 %v638
        %648 = vmatpush.bf16.msra.mxu0 %v637
        %649 = vmatpush.bf16.msra.mxu0 %v636
        %650 = vmatpush.bf16.msra.mxu0 %v635
        %651 = vmatpush.bf16.msra.mxu0 %v634
        %652 = vmatpush.bf16.msra.mxu0 %v633
        %653 = vmatpush.bf16.msra.mxu0 %v632
        %654 = vmatpush.bf16.msra.mxu0 %v631
        %655 = vmatmul.bf16.gmra.mxu0 %v580
        %v656 = vpop.f32.mrf.mxu0
        %v657 = vadd.f32 0.0, %v656
        %v658 = vpop.f32.mrf.mxu0
        %v659 = vadd.f32 0.0, %v658
        %660 = vmatmul.bf16.gmra.mxu0 %v581
        %v661 = vpop.f32.mrf.mxu0
        %v662 = vadd.f32 0.0, %v661
        %v663 = vpop.f32.mrf.mxu0
        %v664 = vadd.f32 0.0, %v663
        %665 = vdwg.mxu0
        %v666 = vmax.f32 %v657, 0.0
        %v667 = vmax.f32 %v659, 0.0
        %v668 = vmax.f32 %v662, 0.0
        %v669 = vmax.f32 %v664, 0.0
        %v670 = vpack.c.bf16 %v667, %v666
        %v671 = vpack.c.bf16 %v669, %v668
        %s672 = scalar_lea.vmem %s6, 32
        %v673 = vld [vmem:[%s672] sm:$0xf]
        %v674 = vld [vmem:[%s672 + $0x4] sm:$0xf]
        %v675 = vld [vmem:[%s672 + $0x8] sm:$0xf]
        %v676 = vld [vmem:[%s672 + $0xc] sm:$0xf]
        %v677 = vld [vmem:[%s672 + $0x10] sm:$0xf]
        %v678 = vld [vmem:[%s672 + $0x14] sm:$0xf]
        %v679 = vld [vmem:[%s672 + $0x18] sm:$0xf]
        %v680 = vld [vmem:[%s672 + $0x1c] sm:$0xf]
        %v689 = vunpack.c.l.b16 %v673
        %v690 = vunpack.c.l.b16 %v674
        %v691 = vunpack.c.l.b16 %v675
        %v692 = vunpack.c.l.b16 %v676
        %v693 = vunpack.c.l.b16 %v677
        %v694 = vunpack.c.l.b16 %v678
        %v695 = vunpack.c.l.b16 %v679
        %v696 = vunpack.c.l.b16 %v680
        %v697 = vpack.c.b16 %v690, %v689
        %v698 = vpack.c.b16 %v692, %v691
        %v699 = vpack.c.b16 %v694, %v693
        %v700 = vpack.c.b16 %v696, %v695
        %vm705 = vcmask 523264
        %v707 = vsel %vm705, %v670, 0
        %v710 = vsel %vm705, %v671, 0
        %712 = vmatpush.bf16.msra.mxu0 0
        %713 = vmatpush.bf16.msra.mxu0 0
        %714 = vmatpush.bf16.msra.mxu0 0
        %715 = vmatpush.bf16.msra.mxu0 0
        %716 = vmatpush.bf16.msra.mxu0 %v700
        %717 = vmatpush.bf16.msra.mxu0 %v699
        %718 = vmatpush.bf16.msra.mxu0 %v698
        %719 = vmatpush.bf16.msra.mxu0 %v697
        %720 = vmatmul.bf16.gmra.mxu0 %v707
        %v721 = vpop.f32.mrf.mxu0
        %v722 = vadd.f32 0.0, %v721
        %v723 = vpop.f32.mrf.mxu0
        %v724 = vadd.f32 0.0, %v723
        %725 = vmatmul.bf16.gmra.mxu0 %v710
        %v726 = vpop.f32.mrf.mxu0
        %v727 = vadd.f32 0.0, %v726
        %v728 = vpop.f32.mrf.mxu0
        %v729 = vadd.f32 0.0, %v728
        %730 = vdwg.mxu0
        %v739 = vunpack.c.l.b16 %v568
        %v740 = vunpack.c.l.b16 %v569
        %v741 = vunpack.c.l.b16 %v570
        %v742 = vunpack.c.l.b16 %v571
        %v743 = vunpack.c.l.b16 %v572
        %v744 = vunpack.c.l.b16 %v573
        %v745 = vunpack.c.l.b16 %v574
        %v746 = vunpack.c.l.b16 %v575
        %v747 = vpack.c.b16 %v740, %v739
        %v748 = vpack.c.b16 %v742, %v741
        %v749 = vpack.c.b16 %v744, %v743
        %v750 = vpack.c.b16 %v746, %v745
        %v756 = vsel %vm705, %v566, 0
        %v759 = vsel %vm705, %v567, 0
        %761 = vmatpush.bf16.msra.mxu0 0
        %762 = vmatpush.bf16.msra.mxu0 0
        %763 = vmatpush.bf16.msra.mxu0 0
        %764 = vmatpush.bf16.msra.mxu0 0
        %765 = vmatpush.bf16.msra.mxu0 %v750
        %766 = vmatpush.bf16.msra.mxu0 %v749
        %767 = vmatpush.bf16.msra.mxu0 %v748
        %768 = vmatpush.bf16.msra.mxu0 %v747
        %769 = vmatmul.bf16.gmra.mxu0 %v756
        %v770 = vpop.f32.mrf.mxu0
        %v771 = vadd.f32 %v722, %v770
        %v772 = vpop.f32.mrf.mxu0
        %v773 = vadd.f32 %v724, %v772
        %774 = vmatmul.bf16.gmra.mxu0 %v759
        %v775 = vpop.f32.mrf.mxu0
        %v776 = vadd.f32 %v727, %v775
        %v777 = vpop.f32.mrf.mxu0
        %v778 = vadd.f32 %v729, %v777
        %779 = vdwg.mxu0
        %v780 = vld [vmem:[%s447] sm:$0xff]
        %v781 = vld [vmem:[%s447 + $0x8] sm:$0xff]
        %v782 = vld [vmem:[%s447 + $0x10] sm:$0xff]
        %v783 = vld [vmem:[%s447 + $0x18] sm:$0xff]
        %v784 = vpack.c.bf16 %v781, %v780
        %v785 = vpack.c.bf16 %v783, %v782
        %s786 = scalar_lea.vmem %s5, 128
        %v787 = vld [vmem:[%s786] sm:$0xf]
        %v788 = vld [vmem:[%s786 + $0x4] sm:$0xf]
        %v789 = vld [vmem:[%s786 + $0x8] sm:$0xf]
        %v790 = vld [vmem:[%s786 + $0xc] sm:$0xf]
        %v791 = vld [vmem:[%s786 + $0x10] sm:$0xf]
        %v792 = vld [vmem:[%s786 + $0x14] sm:$0xf]
        %v793 = vld [vmem:[%s786 + $0x18] sm:$0xf]
        %v794 = vld [vmem:[%s786 + $0x1c] sm:$0xf]
        %v795 = vld [vmem:[%s786 + $0x20] sm:$0xf]
        %v796 = vld [vmem:[%s786 + $0x24] sm:$0xf]
        %v797 = vld [vmem:[%s786 + $0x28] sm:$0xf]
        %v798 = vld [vmem:[%s786 + $0x2c] sm:$0xf]
        %v799 = vld [vmem:[%s786 + $0x30] sm:$0xf]
        %v800 = vld [vmem:[%s786 + $0x34] sm:$0xf]
        %v801 = vld [vmem:[%s786 + $0x38] sm:$0xf]
        %v802 = vld [vmem:[%s786 + $0x3c] sm:$0xf]
        %v819 = vunpack.c.l.b16 %v787
        %v820 = vunpack.c.l.b16 %v788
        %v821 = vunpack.c.l.b16 %v789
        %v822 = vunpack.c.l.b16 %v790
        %v823 = vunpack.c.l.b16 %v791
        %v824 = vunpack.c.l.b16 %v792
        %v825 = vunpack.c.l.b16 %v793
        %v826 = vunpack.c.l.b16 %v794
        %v827 = vunpack.c.l.b16 %v795
        %v828 = vunpack.c.l.b16 %v796
        %v829 = vunpack.c.l.b16 %v797
        %v830 = vunpack.c.l.b16 %v798
        %v831 = vunpack.c.l.b16 %v799
        %v832 = vunpack.c.l.b16 %v800
        %v833 = vunpack.c.l.b16 %v801
        %v834 = vunpack.c.l.b16 %v802
        %v835 = vpack.c.b16 %v820, %v819
        %v836 = vpack.c.b16 %v822, %v821
        %v837 = vpack.c.b16 %v824, %v823
        %v838 = vpack.c.b16 %v826, %v825
        %v839 = vpack.c.b16 %v828, %v827
        %v840 = vpack.c.b16 %v830, %v829
        %v841 = vpack.c.b16 %v832, %v831
        %v842 = vpack.c.b16 %v834, %v833
        %851 = vmatpush.bf16.msra.mxu0 %v842
        %852 = vmatpush.bf16.msra.mxu0 %v841
        %853 = vmatpush.bf16.msra.mxu0 %v840
        %854 = vmatpush.bf16.msra.mxu0 %v839
        %855 = vmatpush.bf16.msra.mxu0 %v838
        %856 = vmatpush.bf16.msra.mxu0 %v837
        %857 = vmatpush.bf16.msra.mxu0 %v836
        %858 = vmatpush.bf16.msra.mxu0 %v835
        %859 = vmatmul.bf16.gmra.mxu0 %v784
        %v860 = vpop.f32.mrf.mxu0
        %v861 = vadd.f32 0.0, %v860
        %v862 = vpop.f32.mrf.mxu0
        %v863 = vadd.f32 0.0, %v862
        %864 = vmatmul.bf16.gmra.mxu0 %v785
        %v865 = vpop.f32.mrf.mxu0
        %v866 = vadd.f32 0.0, %v865
        %v867 = vpop.f32.mrf.mxu0
        %v868 = vadd.f32 0.0, %v867
        %869 = vdwg.mxu0
        %v870 = vmax.f32 %v861, 0.0
        %v871 = vmax.f32 %v863, 0.0
        %v872 = vmax.f32 %v866, 0.0
        %v873 = vmax.f32 %v868, 0.0
        %v874 = vpack.c.bf16 %v871, %v870
        %v875 = vpack.c.bf16 %v873, %v872
        %s876 = scalar_lea.vmem %s6, 64
        %v877 = vld [vmem:[%s876] sm:$0xf]
        %v878 = vld [vmem:[%s876 + $0x4] sm:$0xf]
        %v879 = vld [vmem:[%s876 + $0x8] sm:$0xf]
        %v880 = vld [vmem:[%s876 + $0xc] sm:$0xf]
        %v881 = vld [vmem:[%s876 + $0x10] sm:$0xf]
        %v882 = vld [vmem:[%s876 + $0x14] sm:$0xf]
        %v883 = vld [vmem:[%s876 + $0x18] sm:$0xf]
        %v884 = vld [vmem:[%s876 + $0x1c] sm:$0xf]
        %v893 = vunpack.c.l.b16 %v877
        %v894 = vunpack.c.l.b16 %v878
        %v895 = vunpack.c.l.b16 %v879
        %v896 = vunpack.c.l.b16 %v880
        %v897 = vunpack.c.l.b16 %v881
        %v898 = vunpack.c.l.b16 %v882
        %v899 = vunpack.c.l.b16 %v883
        %v900 = vunpack.c.l.b16 %v884
        %v901 = vpack.c.b16 %v894, %v893
        %v902 = vpack.c.b16 %v896, %v895
        %v903 = vpack.c.b16 %v898, %v897
        %v904 = vpack.c.b16 %v900, %v899
        %v910 = vsel %vm705, %v874, 0
        %v913 = vsel %vm705, %v875, 0
        %915 = vmatpush.bf16.msra.mxu0 0
        %916 = vmatpush.bf16.msra.mxu0 0
        %917 = vmatpush.bf16.msra.mxu0 0
        %918 = vmatpush.bf16.msra.mxu0 0
        %919 = vmatpush.bf16.msra.mxu0 %v904
        %920 = vmatpush.bf16.msra.mxu0 %v903
        %921 = vmatpush.bf16.msra.mxu0 %v902
        %922 = vmatpush.bf16.msra.mxu0 %v901
        %923 = vmatmul.bf16.gmra.mxu0 %v910
        %v924 = vpop.f32.mrf.mxu0
        %v925 = vadd.f32 0.0, %v924
        %v926 = vpop.f32.mrf.mxu0
        %v927 = vadd.f32 0.0, %v926
        %928 = vmatmul.bf16.gmra.mxu0 %v913
        %v929 = vpop.f32.mrf.mxu0
        %v930 = vadd.f32 0.0, %v929
        %v931 = vpop.f32.mrf.mxu0
        %v932 = vadd.f32 0.0, %v931
        %933 = vdwg.mxu0
        %v934 = vadd.f32 %v771, %v925
        %v935 = vadd.f32 %v773, %v927
        %v936 = vadd.f32 %v776, %v930
        %v937 = vadd.f32 %v778, %v932
        %v938 = vld [vmem:[%s461] sm:$0xff]
        %v939 = vld [vmem:[%s461 + $0x8] sm:$0xff]
        %v940 = vld [vmem:[%s461 + $0x10] sm:$0xff]
        %v941 = vld [vmem:[%s461 + $0x18] sm:$0xff]
        %v942 = vpack.c.bf16 %v939, %v938
        %v943 = vpack.c.bf16 %v941, %v940
        %s944 = scalar_lea.vmem %s5, 192
        %v945 = vld [vmem:[%s944] sm:$0xf]
        %v946 = vld [vmem:[%s944 + $0x4] sm:$0xf]
        %v947 = vld [vmem:[%s944 + $0x8] sm:$0xf]
        %v948 = vld [vmem:[%s944 + $0xc] sm:$0xf]
        %v949 = vld [vmem:[%s944 + $0x10] sm:$0xf]
        %v950 = vld [vmem:[%s944 + $0x14] sm:$0xf]
        %v951 = vld [vmem:[%s944 + $0x18] sm:$0xf]
        %v952 = vld [vmem:[%s944 + $0x1c] sm:$0xf]
        %v953 = vld [vmem:[%s944 + $0x20] sm:$0xf]
        %v954 = vld [vmem:[%s944 + $0x24] sm:$0xf]
        %v955 = vld [vmem:[%s944 + $0x28] sm:$0xf]
        %v956 = vld [vmem:[%s944 + $0x2c] sm:$0xf]
        %v957 = vld [vmem:[%s944 + $0x30] sm:$0xf]
        %v958 = vld [vmem:[%s944 + $0x34] sm:$0xf]
        %v959 = vld [vmem:[%s944 + $0x38] sm:$0xf]
        %v960 = vld [vmem:[%s944 + $0x3c] sm:$0xf]
        %v977 = vunpack.c.l.b16 %v945
        %v978 = vunpack.c.l.b16 %v946
        %v979 = vunpack.c.l.b16 %v947
        %v980 = vunpack.c.l.b16 %v948
        %v981 = vunpack.c.l.b16 %v949
        %v982 = vunpack.c.l.b16 %v950
        %v983 = vunpack.c.l.b16 %v951
        %v984 = vunpack.c.l.b16 %v952
        %v985 = vunpack.c.l.b16 %v953
        %v986 = vunpack.c.l.b16 %v954
        %v987 = vunpack.c.l.b16 %v955
        %v988 = vunpack.c.l.b16 %v956
        %v989 = vunpack.c.l.b16 %v957
        %v990 = vunpack.c.l.b16 %v958
        %v991 = vunpack.c.l.b16 %v959
        %v992 = vunpack.c.l.b16 %v960
        %v993 = vpack.c.b16 %v978, %v977
        %v994 = vpack.c.b16 %v980, %v979
        %v995 = vpack.c.b16 %v982, %v981
        %v996 = vpack.c.b16 %v984, %v983
        %v997 = vpack.c.b16 %v986, %v985
        %v998 = vpack.c.b16 %v988, %v987
        %v999 = vpack.c.b16 %v990, %v989
        %v1000 = vpack.c.b16 %v992, %v991
        %1009 = vmatpush.bf16.msra.mxu0 %v1000
        %1010 = vmatpush.bf16.msra.mxu0 %v999
        %1011 = vmatpush.bf16.msra.mxu0 %v998
        %1012 = vmatpush.bf16.msra.mxu0 %v997
        %1013 = vmatpush.bf16.msra.mxu0 %v996
        %1014 = vmatpush.bf16.msra.mxu0 %v995
        %1015 = vmatpush.bf16.msra.mxu0 %v994
        %1016 = vmatpush.bf16.msra.mxu0 %v993
        %1017 = vmatmul.bf16.gmra.mxu0 %v942
        %v1018 = vpop.f32.mrf.mxu0
        %v1019 = vadd.f32 0.0, %v1018
        %v1020 = vpop.f32.mrf.mxu0
        %v1021 = vadd.f32 0.0, %v1020
        %1022 = vmatmul.bf16.gmra.mxu0 %v943
        %v1023 = vpop.f32.mrf.mxu0
        %v1024 = vadd.f32 0.0, %v1023
        %v1025 = vpop.f32.mrf.mxu0
        %v1026 = vadd.f32 0.0, %v1025
        %1027 = vdwg.mxu0
        %v1028 = vmax.f32 %v1019, 0.0
        %v1029 = vmax.f32 %v1021, 0.0
        %v1030 = vmax.f32 %v1024, 0.0
        %v1031 = vmax.f32 %v1026, 0.0
        %v1032 = vpack.c.bf16 %v1029, %v1028
        %v1033 = vpack.c.bf16 %v1031, %v1030
        %s1034 = scalar_lea.vmem %s6, 96
        %v1035 = vld [vmem:[%s1034] sm:$0xf]
        %v1036 = vld [vmem:[%s1034 + $0x4] sm:$0xf]
        %v1037 = vld [vmem:[%s1034 + $0x8] sm:$0xf]
        %v1038 = vld [vmem:[%s1034 + $0xc] sm:$0xf]
        %v1039 = vld [vmem:[%s1034 + $0x10] sm:$0xf]
        %v1040 = vld [vmem:[%s1034 + $0x14] sm:$0xf]
        %v1041 = vld [vmem:[%s1034 + $0x18] sm:$0xf]
        %v1042 = vld [vmem:[%s1034 + $0x1c] sm:$0xf]
        %v1051 = vunpack.c.l.b16 %v1035
        %v1052 = vunpack.c.l.b16 %v1036
        %v1053 = vunpack.c.l.b16 %v1037
        %v1054 = vunpack.c.l.b16 %v1038
        %v1055 = vunpack.c.l.b16 %v1039
        %v1056 = vunpack.c.l.b16 %v1040
        %v1057 = vunpack.c.l.b16 %v1041
        %v1058 = vunpack.c.l.b16 %v1042
        %v1059 = vpack.c.b16 %v1052, %v1051
        %v1060 = vpack.c.b16 %v1054, %v1053
        %v1061 = vpack.c.b16 %v1056, %v1055
        %v1062 = vpack.c.b16 %v1058, %v1057
        %v1068 = vsel %vm705, %v1032, 0
        %v1071 = vsel %vm705, %v1033, 0
        %1073 = vmatpush.bf16.msra.mxu0 0
        %1074 = vmatpush.bf16.msra.mxu0 0
        %1075 = vmatpush.bf16.msra.mxu0 0
        %1076 = vmatpush.bf16.msra.mxu0 0
        %1077 = vmatpush.bf16.msra.mxu0 %v1062
        %1078 = vmatpush.bf16.msra.mxu0 %v1061
        %1079 = vmatpush.bf16.msra.mxu0 %v1060
        %1080 = vmatpush.bf16.msra.mxu0 %v1059
        %1081 = vmatmul.bf16.gmra.mxu0 %v1068
        %v1082 = vpop.f32.mrf.mxu0
        %v1083 = vadd.f32 0.0, %v1082
        %v1084 = vpop.f32.mrf.mxu0
        %v1085 = vadd.f32 0.0, %v1084
        %1086 = vmatmul.bf16.gmra.mxu0 %v1071
        %v1087 = vpop.f32.mrf.mxu0
        %v1088 = vadd.f32 0.0, %v1087
        %v1089 = vpop.f32.mrf.mxu0
        %v1090 = vadd.f32 0.0, %v1089
        %1091 = vdwg.mxu0
        %v1092 = vadd.f32 %v934, %v1083
        %v1093 = vadd.f32 %v935, %v1085
        %v1094 = vadd.f32 %v936, %v1088
        %v1095 = vadd.f32 %v937, %v1090
        %v1096 = vmax.f32 %v1092, 0.0
        %v1097 = vmax.f32 %v1093, 0.0
        %v1098 = vmax.f32 %v1094, 0.0
        %v1099 = vmax.f32 %v1095, 0.0
        %v1100 = vld [vmem:[%s405] sm:$0xff]
        %v1101 = vld [vmem:[%s405 + $0x8] sm:$0xff]
        %v1102 = vld [vmem:[%s405 + $0x10] sm:$0xff]
        %v1103 = vld [vmem:[%s405 + $0x18] sm:$0xff]
        %v1104 = vadd.f32 %v1100, %v1096
        %v1105 = vadd.f32 %v1101, %v1097
        %v1106 = vadd.f32 %v1102, %v1098
        %v1107 = vadd.f32 %v1103, %v1099
        %1108 = vst [vmem:[%s396] sm:$0xff] %v1104
        %1109 = vst [vmem:[%s396 + $0x8] sm:$0xff] %v1105
        %1110 = vst [vmem:[%s396 + $0x10] sm:$0xff] %v1106
        %1111 = vst [vmem:[%s396 + $0x18] sm:$0xff] %v1107
        %s1112 = sand.u32 %s201, 1
        %s1113 = scalar_lea.sflag [#allocation3], %s1112
        %s1114 = sand.u32 %s201, 1
        %s1115 = smul.addr %s1114, 32
        %s1116 = scalar_lea.vmem [#allocation2], %s1115
        // Predicated region
        $region49: #{tpu_custom_call.1} parent=47 // pred_check
          %p1117 = pneg %p211
        $region50: #{tpu_custom_call.1} parent=47 // pred_check_branch
          %1119 = sbr.rel (%p1117) target = $region52
        $region51: #{tpu_custom_call.1} parent=47 // pred_region
          %s1120 = smul.u32 4, %s21
          %s1121 = ssub.s32 5, %s1120
          %p1122 = scmp.lt.s32.totalorder %s1121, 4
          %s1123 = scalar_select %p1122, %s1121, 4
          %s1124 = smul.u32 8, %s1123
          %s1125 = ssub.s32 32, %s1124
          %s1126 = sshll.u32 %s1125, 4
          %1127 = vsyncadd %s1113, %s1126
          %p1128 = scmp.ne.s32.totalorder 0, %s1124
          %s1129 = smul.addr %s1120, 8
          %s1130 = scalar_lea.hbm %s7, %s1129
          %s1131 = smul.u32 8, %s1123
          %s1132 = sshll.u32 %s1116, 4
          %s1133 = int_to_ptr.vmem [resolvable:$true] %s1132
          %s1134 = sshll.u32 %s1130, 4
          %s1135 = int_to_ptr.hbm [resolvable:$true] %s1134
          %s1136 = sshll.u32 %s1131, 4
          %1140 = dma.vmem_to_hbm [thread:$0]  (%p1128), %s1133, %s1136, %s1135, %s1113, 128, 128, 8
        $region52: #{tpu_custom_call.1} parent=47 // pred_fallthru
          _
      $region48: #{tpu_custom_call.1} parent=5 // pred_fallthru
        _
      %p1141 = scmp.le.s32.totalorder 2, %s16
      // Predicated region
      $region53: #{tpu_custom_call.1} parent=5 // pred_check
        %p1142 = pneg %p1141
      $region54: #{tpu_custom_call.1} parent=5 // pred_check_branch
        %1144 = sbr.rel (%p1142) target = $region56
      $region55: #{tpu_custom_call.1} parent=5 // pred_region
        %s1145 = ssub.s32 %s16, 2
        // Predicated region
        $region57: #{tpu_custom_call.1} parent=55 // pred_check
          %p1146 = pneg %p217
        $region58: #{tpu_custom_call.1} parent=55 // pred_check_branch
          %1148 = sbr.rel (%p1146) target = $region60
        $region59: #{tpu_custom_call.1} parent=55 // pred_region
          %s1149 = sand.u32 %s202, 1
          %s1150 = scalar_lea.sflag [#allocation3], %s1149
          %s1151 = sand.u32 %s202, 1
          %s1152 = smul.addr %s1151, 32
          %s1153 = scalar_lea.vmem [#allocation2], %s1152
          %1155 = dma.done %s1150, 512
        $region60: #{tpu_custom_call.1} parent=55 // pred_fallthru
          _
      $region56: #{tpu_custom_call.1} parent=5 // pred_fallthru
        _
    $region6: #{tpu_custom_call.1} parent=1 // loop_footer
      %s20 = sadd.s32 1, %s16
    $region7: #{tpu_custom_call.1} parent=1 // loop_footer_branch
      %15 = sbr.rel target = $region3
    $region8: #{tpu_custom_call.1} parent=1 // loop_exit
      _
    %1156 = vsyncpa [#allocation3], 1
    %s1157 = scalar_lea.sflag [#allocation3], 1
    %1158 = vsyncpa %s1157, 1

</llo_original>
